<compile_context>
chip_gen: v5e
topology: v5e:2x2
jax: 0.10.0
libtpu: 0.0.40
codegen_flags: <defaults>
</compile_context>

<pallas_src>
import jax
import jax.numpy as jnp
from jax.experimental import pallas as pl
from jax.experimental.pallas import tpu as pltpu

_LN_EPS = 1e-5                     # torch.nn.LayerNorm default
_INV_SQRT2 = 0.7071067811865476
_SQRT_2_OVER_PI = 0.7978845608028654


# ---------------------------------------------------------------------------
# In-kernel helpers
# ---------------------------------------------------------------------------
def _layernorm(v, g, b):
    mu = jnp.mean(v, axis=-1, keepdims=True)
    vc = v - mu
    var = jnp.mean(vc * vc, axis=-1, keepdims=True)
    return vc * jax.lax.rsqrt(var + _LN_EPS) * g + b


def _gelu_tanh(x):
    # tanh-form GELU; tanh lowers to the EUP slot.  Max deviation from the exact erf
    # GELU is ~1e-3, well inside the bf16-matmul noise floor.
    return 0.5 * x * (1.0 + jnp.tanh(_SQRT_2_OVER_PI * (x + 0.044715 * x * x * x)))


# ---------------------------------------------------------------------------
# Fused Mixer kernel: one grid step = one batch tile of shape (tb, C, P)
# ---------------------------------------------------------------------------
def _mixer_kernel(x_ref, lnp_ref, w1a_ref, w2a_ref, w1bt_ref, w2bt_ref, o_ref):
    tb, C, P = x_ref.shape
    Hc = w1a_ref.shape[0]          # 4*C

    x = x_ref[...]                                              # (tb, C, P) f32

    # ---- block 1: norm_1 -> MixerMlp('R', C) channel mix -> residual -------
    ln1 = _layernorm(x, lnp_ref[0:1, :], lnp_ref[1:2, :]).astype(jnp.bfloat16)
    # Batched matmuls over the whole tile (batch dim = tb), f32 accumulation.
    h1 = jnp.einsum('bhc,bcp->bhp',
                    jnp.broadcast_to(w1a_ref[...], (tb, Hc, C)), ln1,
                    preferred_element_type=jnp.float32)         # (tb, Hc, P)
    h1 = _gelu_tanh(h1).astype(jnp.bfloat16)
    y = jnp.einsum('bch,bhp->bcp',
                   jnp.broadcast_to(w2a_ref[...], (tb, C, Hc)), h1,
                   preferred_element_type=jnp.float32) + x      # (tb, C, P)

    # ---- block 2: norm_2 -> MixerMlp('L', P) patch mix -> residual ----------
    y2 = y.reshape(tb * C, P)          # leading-axis collapse (layout no-op, C % 8 == 0)
    ln2 = _layernorm(y2, lnp_ref[2:3, :], lnp_ref[3:4, :]).astype(jnp.bfloat16)
    h2 = jnp.dot(ln2, w1bt_ref[...],
                 preferred_element_type=jnp.float32)            # (tb*C, 4P)
    h2 = _gelu_tanh(h2).astype(jnp.bfloat16)
    out2 = jnp.dot(h2, w2bt_ref[...],
                   preferred_element_type=jnp.float32) + y2     # (tb*C, P)

    o_ref[...] = out2.reshape(tb, C, P)                         # one lane-dense store


# ---------------------------------------------------------------------------
# Wrapper
# ---------------------------------------------------------------------------
def prepare_params(params):
    """One-time prep (outside the hot path): pack LN params into one (4, P) array,
    cast weights to bf16, pre-transpose the 'L'-side weights."""
    bf = jnp.bfloat16
    ln = jnp.stack([params["g1"], params["b1"],
                    params["g2"], params["b2"]], axis=0).astype(jnp.float32)   # (4, P)
    return {
        "ln": ln,
        "w1a": params["mlp1_w1"].astype(bf),        # (4C, C) torch layout
        "w2a": params["mlp1_w2"].astype(bf),        # (C, 4C) torch layout
        "w1bT": params["mlp2_w1"].T.astype(bf),     # (P, 4P)
        "w2bT": params["mlp2_w2"].T.astype(bf),     # (4P, P)
    }


def _pick_tb(B, C, P):
    """Batch-tile size: target ~1 MiB activation tiles (HBM roofline), but keep at
    least 2 grid steps when B >= 16 so v7x's two TensorCores both get work; cap so
    the batched channel-mix matmul does not unroll absurdly."""
    if B <= 8:
        return B
    row_bytes = C * P * 4
    tb = min(B // 2, 128, max(8, (1024 * 1024) // row_bytes))
    tb = max(8, (tb // 8) * 8)
    return min(tb, B)


def mixer_forward(x, p):
    """x: (C, B, P) float32. Returns (C, B, P) float32."""
    C, B, P = x.shape
    Hc, Hp = 4 * C, 4 * P

    # Batch-leading layout for contiguous tile DMAs + no-op (tb*C, P) collapse.
    xb = jnp.transpose(x, (1, 0, 2))                # (B, C, P)

    tb = _pick_tb(B, C, P)
    nb = pl.cdiv(B, tb)

    tile_f32 = tb * C * P * 4
    wbytes = (Hc * C + C * Hc + P * Hp + Hp * P) * 2 + 4 * P * 4
    # in+out tiles double-buffered, weights double-buffered, f32+bf16 intermediates.
    needed = 4 * tile_f32 + 2 * wbytes + 12 * tile_f32
    # 48 MiB cap: leaves headroom on v7x's 64 MiB VMEM; fine on v5e/v6e (128 MiB).
    vmem_limit = int(min(max(2 * needed, 16 * 1024 * 1024), 48 * 1024 * 1024))

    flops = B * (16 * C * C * P + 16 * C * P * P)           # 4 matmuls per batch slab
    transcendentals = B * (Hc * P + C * Hp)                 # one tanh per GELU element
    bytes_accessed = 2 * C * B * P * 4 + wbytes             # weights read once

    out_b = pl.pallas_call(
        _mixer_kernel,
        out_shape=jax.ShapeDtypeStruct((B, C, P), jnp.float32),
        grid=(nb,),
        in_specs=[
            pl.BlockSpec((tb, C, P), lambda i: (i, 0, 0)),   # activation tile
            pl.BlockSpec((4, P), lambda i: (0, 0)),          # packed LN params
            pl.BlockSpec((Hc, C), lambda i: (0, 0)),         # w1a
            pl.BlockSpec((C, Hc), lambda i: (0, 0)),         # w2a
            pl.BlockSpec((P, Hp), lambda i: (0, 0)),         # w1b^T
            pl.BlockSpec((Hp, P), lambda i: (0, 0)),         # w2b^T
        ],
        out_specs=pl.BlockSpec((tb, C, P), lambda i: (i, 0, 0)),
        compiler_params=pltpu.CompilerParams(
            dimension_semantics=("parallel",),
            vmem_limit_bytes=vmem_limit,
        ),
        cost_estimate=pl.CostEstimate(
            flops=flops,
            transcendentals=transcendentals,
            bytes_accessed=bytes_accessed,
        ),
    )(xb, p["ln"], p["w1a"], p["w2a"], p["w1bT"], p["w2bT"])

    return jnp.transpose(out_b, (1, 0, 2))          # back to (C, B, P)


# ---------------------------------------------------------------------------
# Pure-JAX reference (mirrors the PyTorch forward exactly, f32 / exact-erf GELU)
# ---------------------------------------------------------------------------
def mixer_reference(x, params):
    def ln(v, g, b):
        mu = v.mean(-1, keepdims=True)
        var = ((v - mu) ** 2).mean(-1, keepdims=True)
        return (v - mu) / jnp.sqrt(var + _LN_EPS) * g + b

    def mlp(v, w1, w2):  # torch Linear convention: out = v @ w.T
        h = v @ w1.T
        h = 0.5 * h * (1.0 + jax.scipy.special.erf(h * _INV_SQRT2))
        return h @ w2.T

    g1, b1, g2, b2 = params["g1"], params["b1"], params["g2"], params["b2"]
    w1a, w2a = params["mlp1_w1"], params["mlp1_w2"]
    w1b, w2b = params["mlp2_w1"], params["mlp2_w2"]

    ln1 = ln(x, g1, b1)
    m1 = jnp.transpose(mlp(jnp.transpose(ln1, (2, 1, 0)), w1a, w2a), (2, 1, 0))
    y_tmp = m1 + x
    out = mlp(ln(y_tmp, g2, b2), w1b, w2b) + y_tmp
    return out


if __name__ == "__main__":
    # Small shapes consistent with the module layout (C, B, P):
    C = 8     # channel_dim  (MixerMlp('R', C) -> x.shape[0]); multiple of 8
    B = 16    # batch        -> 2 grid steps (v7x megacore gets both TCs busy)
    P = 128   # patch_dim    (LayerNorm(P)     -> x.shape[2])

    key = jax.random.PRNGKey(0)
    ks = jax.random.split(key, 9)

    x = jax.random.normal(ks[0], (C, B, P), jnp.float32)
    params = {
        "g1": 1.0 + 0.1 * jax.random.normal(ks[1], (P,), jnp.float32),
        "b1": 0.1 * jax.random.normal(ks[2], (P,), jnp.float32),
        "g2": 1.0 + 0.1 * jax.random.normal(ks[3], (P,), jnp.float32),
        "b2": 0.1 * jax.random.normal(ks[4], (P,), jnp.float32),
        # torch nn.Linear(dim, 4*dim, bias=False).weight has shape (4*dim, dim)
        "mlp1_w1": jax.random.normal(ks[5], (4 * C, C), jnp.float32) / jnp.sqrt(C),
        "mlp1_w2": jax.random.normal(ks[6], (C, 4 * C), jnp.float32) / jnp.sqrt(4 * C),
        "mlp2_w1": jax.random.normal(ks[7], (4 * P, P), jnp.float32) / jnp.sqrt(P),
        "mlp2_w2": jax.random.normal(ks[8], (P, 4 * P), jnp.float32) / jnp.sqrt(4 * P),
    }

    prepared = prepare_params(params)   # one-time weight cast/pack (outside hot path)

    fwd = jax.jit(mixer_forward)
    out = jax.block_until_ready(fwd(x, prepared))
    ref = jax.block_until_ready(mixer_reference(x, params))

    assert out.shape == (C, B, P) and out.dtype == jnp.float32
    # Tolerance covers bf16 MXU matmuls + tanh-form GELU vs the f32 exact-erf reference.
    err = float(jnp.max(jnp.abs(out - ref)))
    assert jnp.allclose(out, ref, atol=1e-1, rtol=1e-1), (
        "mismatch: max abs err = %e" % err)
    print("KERNEL_OK")
</pallas_src>

<mosaic_0001>
module attributes {stable_mosaic.version = 11 : i64} {
  func.func @_mixer_kernel(%arg0: i32, %arg1: memref<8x8x128xf32, #tpu.memory_space<vmem>>, %arg2: memref<4x128xf32, #tpu.memory_space<vmem>>, %arg3: memref<32x8xbf16, #tpu.memory_space<vmem>>, %arg4: memref<8x32xbf16, #tpu.memory_space<vmem>>, %arg5: memref<128x512xbf16, #tpu.memory_space<vmem>>, %arg6: memref<512x128xbf16, #tpu.memory_space<vmem>>, %arg7: memref<8x8x128xf32, #tpu.memory_space<vmem>>) attributes {dimension_semantics = [#tpu.dimension_semantics<parallel>], iteration_bounds = array<i64: 2>, scalar_prefetch = 0 : i64, scratch_operands = 0 : i64, tpu.core_type = #tpu.core_type<tc>, window_params = [{transform_indices = @transform_0, window_bounds = array<i64: 8, 8, 128>}, {pipeline_mode = #tpu.pipeline_mode<synchronous>, transform_indices = @transform_1, window_bounds = array<i64: 4, 128>}, {pipeline_mode = #tpu.pipeline_mode<synchronous>, transform_indices = @transform_2, window_bounds = array<i64: 32, 8>}, {pipeline_mode = #tpu.pipeline_mode<synchronous>, transform_indices = @transform_3, window_bounds = array<i64: 8, 32>}, {pipeline_mode = #tpu.pipeline_mode<synchronous>, transform_indices = @transform_4, window_bounds = array<i64: 128, 512>}, {pipeline_mode = #tpu.pipeline_mode<synchronous>, transform_indices = @transform_5, window_bounds = array<i64: 512, 128>}, {transform_indices = @transform_6, window_bounds = array<i64: 8, 8, 128>}]} {
    %c0 = arith.constant 0 : index
    %c0_0 = arith.constant 0 : index
    %c0_1 = arith.constant 0 : index
    %0 = vector.load %arg1[%c0, %c0_0, %c0_1] : memref<8x8x128xf32, #tpu.memory_space<vmem>>, vector<8x8x128xf32>
    %c0_2 = arith.constant 0 : index
    %c0_3 = arith.constant 0 : index
    %1 = vector.load %arg2[%c0_2, %c0_3] : memref<4x128xf32, #tpu.memory_space<vmem>>, vector<1x128xf32>
    %c1 = arith.constant 1 : index
    %c0_4 = arith.constant 0 : index
    %2 = vector.load %arg2[%c1, %c0_4] : memref<4x128xf32, #tpu.memory_space<vmem>>, vector<1x128xf32>
    %cst = arith.constant dense<0.000000e+00> : vector<8x8xf32>
    %3 = vector.multi_reduction <add>, %0, %cst [2] : vector<8x8x128xf32> to vector<8x8xf32>
    %4 = vector.shape_cast %3 : vector<8x8xf32> to vector<8x8x1xf32>
    %cst_5 = arith.constant 1.280000e+02 : f32
    %5 = vector.broadcast %cst_5 : f32 to vector<8x8x1xf32>
    %6 = arith.divf %4, %5 : vector<8x8x1xf32>
    %7 = vector.broadcast %6 : vector<8x8x1xf32> to vector<8x8x128xf32>
    %8 = arith.subf %0, %7 : vector<8x8x128xf32>
    %9 = arith.mulf %8, %8 : vector<8x8x128xf32>
    %cst_6 = arith.constant dense<0.000000e+00> : vector<8x8xf32>
    %10 = vector.multi_reduction <add>, %9, %cst_6 [2] : vector<8x8x128xf32> to vector<8x8xf32>
    %11 = vector.shape_cast %10 : vector<8x8xf32> to vector<8x8x1xf32>
    %cst_7 = arith.constant 1.280000e+02 : f32
    %12 = vector.broadcast %cst_7 : f32 to vector<8x8x1xf32>
    %13 = arith.divf %11, %12 : vector<8x8x1xf32>
    %cst_8 = arith.constant 9.99999974E-6 : f32
    %14 = vector.broadcast %cst_8 : f32 to vector<8x8x1xf32>
    %15 = arith.addf %13, %14 : vector<8x8x1xf32>
    %16 = math.rsqrt %15 : vector<8x8x1xf32>
    %17 = vector.broadcast %16 : vector<8x8x1xf32> to vector<8x8x128xf32>
    %18 = arith.mulf %8, %17 : vector<8x8x128xf32>
    %19 = vector.shape_cast %1 : vector<1x128xf32> to vector<1x1x128xf32>
    %20 = vector.broadcast %19 : vector<1x1x128xf32> to vector<8x8x128xf32>
    %21 = arith.mulf %18, %20 : vector<8x8x128xf32>
    %22 = vector.shape_cast %2 : vector<1x128xf32> to vector<1x1x128xf32>
    %23 = vector.broadcast %22 : vector<1x1x128xf32> to vector<8x8x128xf32>
    %24 = arith.addf %21, %23 : vector<8x8x128xf32>
    %25 = arith.truncf %24 : vector<8x8x128xf32> to vector<8x8x128xbf16>
    %c0_9 = arith.constant 0 : index
    %c0_10 = arith.constant 0 : index
    %26 = vector.load %arg3[%c0_9, %c0_10] : memref<32x8xbf16, #tpu.memory_space<vmem>>, vector<32x8xbf16>
    %27 = vector.shape_cast %26 : vector<32x8xbf16> to vector<1x32x8xbf16>
    %28 = vector.broadcast %27 : vector<1x32x8xbf16> to vector<8x32x8xbf16>
    "tpu.trace_start"() <{level = 10 : i32, message = "bhc,bcp->bhp"}> : () -> ()
    %cst_11 = arith.constant dense<0.000000e+00> : vector<8x32x128xf32>
    %29 = tpu.matmul %28, %25, %cst_11 {dimension_numbers = #tpu.dot_dimension_numbers<[2], [1], [1], [2], [0, 0, 0, 1, 1, 2], [0], [0]>} : vector<8x32x8xbf16>, vector<8x8x128xbf16>, vector<8x32x128xf32> -> vector<8x32x128xf32>
    "tpu.trace_stop"() : () -> ()
    %cst_12 = arith.constant 5.000000e-01 : f32
    %30 = vector.broadcast %cst_12 : f32 to vector<8x32x128xf32>
    %31 = arith.mulf %30, %29 : vector<8x32x128xf32>
    %cst_13 = arith.constant 4.471500e-02 : f32
    %32 = vector.broadcast %cst_13 : f32 to vector<8x32x128xf32>
    %33 = arith.mulf %32, %29 : vector<8x32x128xf32>
    %34 = arith.mulf %33, %29 : vector<8x32x128xf32>
    %35 = arith.mulf %34, %29 : vector<8x32x128xf32>
    %36 = arith.addf %29, %35 : vector<8x32x128xf32>
    %cst_14 = arith.constant 0.797884583 : f32
    %37 = vector.broadcast %cst_14 : f32 to vector<8x32x128xf32>
    %38 = arith.mulf %37, %36 : vector<8x32x128xf32>
    %39 = math.tanh %38 : vector<8x32x128xf32>
    %cst_15 = arith.constant 1.000000e+00 : f32
    %40 = vector.broadcast %cst_15 : f32 to vector<8x32x128xf32>
    %41 = arith.addf %40, %39 : vector<8x32x128xf32>
    %42 = arith.mulf %31, %41 : vector<8x32x128xf32>
    %43 = arith.truncf %42 : vector<8x32x128xf32> to vector<8x32x128xbf16>
    %c0_16 = arith.constant 0 : index
    %c0_17 = arith.constant 0 : index
    %44 = vector.load %arg4[%c0_16, %c0_17] : memref<8x32xbf16, #tpu.memory_space<vmem>>, vector<8x32xbf16>
    %45 = vector.shape_cast %44 : vector<8x32xbf16> to vector<1x8x32xbf16>
    %46 = vector.broadcast %45 : vector<1x8x32xbf16> to vector<8x8x32xbf16>
    "tpu.trace_start"() <{level = 10 : i32, message = "bch,bhp->bcp"}> : () -> ()
    %cst_18 = arith.constant dense<0.000000e+00> : vector<8x8x128xf32>
    %47 = tpu.matmul %46, %43, %cst_18 {dimension_numbers = #tpu.dot_dimension_numbers<[2], [1], [1], [2], [0, 0, 0, 1, 1, 2], [0], [0]>} : vector<8x8x32xbf16>, vector<8x32x128xbf16>, vector<8x8x128xf32> -> vector<8x8x128xf32>
    "tpu.trace_stop"() : () -> ()
    %48 = arith.addf %47, %0 : vector<8x8x128xf32>
    %49 = vector.shape_cast %48 : vector<8x8x128xf32> to vector<64x128xf32>
    %c2 = arith.constant 2 : index
    %c0_19 = arith.constant 0 : index
    %50 = vector.load %arg2[%c2, %c0_19] : memref<4x128xf32, #tpu.memory_space<vmem>>, vector<1x128xf32>
    %c3 = arith.constant 3 : index
    %c0_20 = arith.constant 0 : index
    %51 = vector.load %arg2[%c3, %c0_20] : memref<4x128xf32, #tpu.memory_space<vmem>>, vector<1x128xf32>
    %cst_21 = arith.constant dense<0.000000e+00> : vector<64xf32>
    %52 = vector.multi_reduction <add>, %49, %cst_21 [1] : vector<64x128xf32> to vector<64xf32>
    %53 = vector.shape_cast %52 : vector<64xf32> to vector<64x1xf32>
    %cst_22 = arith.constant 1.280000e+02 : f32
    %54 = vector.broadcast %cst_22 : f32 to vector<64x1xf32>
    %55 = arith.divf %53, %54 : vector<64x1xf32>
    %56 = vector.broadcast %55 : vector<64x1xf32> to vector<64x128xf32>
    %57 = arith.subf %49, %56 : vector<64x128xf32>
    %58 = arith.mulf %57, %57 : vector<64x128xf32>
    %cst_23 = arith.constant dense<0.000000e+00> : vector<64xf32>
    %59 = vector.multi_reduction <add>, %58, %cst_23 [1] : vector<64x128xf32> to vector<64xf32>
    %60 = vector.shape_cast %59 : vector<64xf32> to vector<64x1xf32>
    %cst_24 = arith.constant 1.280000e+02 : f32
    %61 = vector.broadcast %cst_24 : f32 to vector<64x1xf32>
    %62 = arith.divf %60, %61 : vector<64x1xf32>
    %cst_25 = arith.constant 9.99999974E-6 : f32
    %63 = vector.broadcast %cst_25 : f32 to vector<64x1xf32>
    %64 = arith.addf %62, %63 : vector<64x1xf32>
    %65 = math.rsqrt %64 : vector<64x1xf32>
    %66 = vector.broadcast %65 : vector<64x1xf32> to vector<64x128xf32>
    %67 = arith.mulf %57, %66 : vector<64x128xf32>
    %68 = vector.broadcast %50 : vector<1x128xf32> to vector<64x128xf32>
    %69 = arith.mulf %67, %68 : vector<64x128xf32>
    %70 = vector.broadcast %51 : vector<1x128xf32> to vector<64x128xf32>
    %71 = arith.addf %69, %70 : vector<64x128xf32>
    %72 = arith.truncf %71 : vector<64x128xf32> to vector<64x128xbf16>
    %c0_26 = arith.constant 0 : index
    %c0_27 = arith.constant 0 : index
    %73 = vector.load %arg5[%c0_26, %c0_27] : memref<128x512xbf16, #tpu.memory_space<vmem>>, vector<128x512xbf16>
    %cst_28 = arith.constant dense<0.000000e+00> : vector<64x512xf32>
    %74 = tpu.matmul %72, %73, %cst_28 {dimension_numbers = #tpu.dot_dimension_numbers<[1], [0], [0], [1], [0, 0, 1, 1], [], []>} : vector<64x128xbf16>, vector<128x512xbf16>, vector<64x512xf32> -> vector<64x512xf32>
    %cst_29 = arith.constant 5.000000e-01 : f32
    %75 = vector.broadcast %cst_29 : f32 to vector<64x512xf32>
    %76 = arith.mulf %75, %74 : vector<64x512xf32>
    %cst_30 = arith.constant 4.471500e-02 : f32
    %77 = vector.broadcast %cst_30 : f32 to vector<64x512xf32>
    %78 = arith.mulf %77, %74 : vector<64x512xf32>
    %79 = arith.mulf %78, %74 : vector<64x512xf32>
    %80 = arith.mulf %79, %74 : vector<64x512xf32>
    %81 = arith.addf %74, %80 : vector<64x512xf32>
    %cst_31 = arith.constant 0.797884583 : f32
    %82 = vector.broadcast %cst_31 : f32 to vector<64x512xf32>
    %83 = arith.mulf %82, %81 : vector<64x512xf32>
    %84 = math.tanh %83 : vector<64x512xf32>
    %cst_32 = arith.constant 1.000000e+00 : f32
    %85 = vector.broadcast %cst_32 : f32 to vector<64x512xf32>
    %86 = arith.addf %85, %84 : vector<64x512xf32>
    %87 = arith.mulf %76, %86 : vector<64x512xf32>
    %88 = arith.truncf %87 : vector<64x512xf32> to vector<64x512xbf16>
    %c0_33 = arith.constant 0 : index
    %c0_34 = arith.constant 0 : index
    %89 = vector.load %arg6[%c0_33, %c0_34] : memref<512x128xbf16, #tpu.memory_space<vmem>>, vector<512x128xbf16>
    %cst_35 = arith.constant dense<0.000000e+00> : vector<64x128xf32>
    %90 = tpu.matmul %88, %89, %cst_35 {dimension_numbers = #tpu.dot_dimension_numbers<[1], [0], [0], [1], [0, 0, 1, 1], [], []>} : vector<64x512xbf16>, vector<512x128xbf16>, vector<64x128xf32> -> vector<64x128xf32>
    %91 = arith.addf %90, %49 : vector<64x128xf32>
    %92 = vector.shape_cast %91 : vector<64x128xf32> to vector<8x8x128xf32>
    %c0_36 = arith.constant 0 : index
    %c0_37 = arith.constant 0 : index
    %c0_38 = arith.constant 0 : index
    %93 = vector.load %arg7[%c0_36, %c0_37, %c0_38] : memref<8x8x128xf32, #tpu.memory_space<vmem>>, vector<8x8x128xf32>
    tpu.vector_store %arg7[%c0_36, %c0_37, %c0_38], %92 {strides = array<i32>} : memref<8x8x128xf32, #tpu.memory_space<vmem>>, vector<8x8x128xf32>,
    return
  }
  func.func @transform_0(%arg0: i32) -> (i32, i32, i32) {
    %c0_i32 = arith.constant 0 : i32
    %c0_i32_0 = arith.constant 0 : i32
    %c0_i32_1 = arith.constant 0 : i32
    return %arg0, %c0_i32, %c0_i32_0 : i32, i32, i32
  }
  func.func @transform_1(%arg0: i32) -> (i32, i32) {
    %c0_i32 = arith.constant 0 : i32
    %c0_i32_0 = arith.constant 0 : i32
    %c0_i32_1 = arith.constant 0 : i32
    return %c0_i32, %c0_i32_0 : i32, i32
  }
  func.func @transform_2(%arg0: i32) -> (i32, i32) {
    %c0_i32 = arith.constant 0 : i32
    %c0_i32_0 = arith.constant 0 : i32
    %c0_i32_1 = arith.constant 0 : i32
    return %c0_i32, %c0_i32_0 : i32, i32
  }
  func.func @transform_3(%arg0: i32) -> (i32, i32) {
    %c0_i32 = arith.constant 0 : i32
    %c0_i32_0 = arith.constant 0 : i32
    %c0_i32_1 = arith.constant 0 : i32
    return %c0_i32, %c0_i32_0 : i32, i32
  }
  func.func @transform_4(%arg0: i32) -> (i32, i32) {
    %c0_i32 = arith.constant 0 : i32
    %c0_i32_0 = arith.constant 0 : i32
    %c0_i32_1 = arith.constant 0 : i32
    return %c0_i32, %c0_i32_0 : i32, i32
  }
  func.func @transform_5(%arg0: i32) -> (i32, i32) {
    %c0_i32 = arith.constant 0 : i32
    %c0_i32_0 = arith.constant 0 : i32
    %c0_i32_1 = arith.constant 0 : i32
    return %c0_i32, %c0_i32_0 : i32, i32
  }
  func.func @transform_6(%arg0: i32) -> (i32, i32, i32) {
    %c0_i32 = arith.constant 0 : i32
    %c0_i32_0 = arith.constant 0 : i32
    %c0_i32_1 = arith.constant 0 : i32
    return %arg0, %c0_i32, %c0_i32_0 : i32, i32, i32
  }
}

</mosaic_0001>

<llo_original>
// kernel: mixer_forward.1
$region0: #{mixer_forward.1}
  #allocation0 [shape = 'u32[]', space=smem, size = 0x4, offset = 0x4, fixed_abs, tag = 'smem constant byte address 0x4 - core index']
  #allocation1 [shape = 'u32[72,128]{1,0:T(1,128)}', space=vmem, size = 0x9000, scoped, tag = 'internal scratch']
  %s0 = inlined_call_operand.vmem [shape: f32[16,8,128], index: 0, kind: input, shape index: {}]
  %s1 = inlined_call_operand.vmem [shape: f32[4,128], index: 1, kind: input, shape index: {}]
  %s2 = inlined_call_operand.vmem [shape: bf16[32,8], index: 2, kind: input, shape index: {}]
  %s3 = inlined_call_operand.vmem [shape: bf16[8,32], index: 3, kind: input, shape index: {}]
  %s4 = inlined_call_operand.vmem [shape: bf16[128,512], index: 4, kind: input, shape index: {}]
  %s5 = inlined_call_operand.hbm [shape: bf16[512,128], index: 5, kind: input, shape index: {}]
  %s6 = inlined_call_operand.vmem [shape: f32[16,8,128], index: 6, kind: output, shape index: {}]
  %s7 = sld [smem:[#allocation0]]
  $region61: #{mixer_forward.1} parent=0
    _
  %s9 = ssub.s32 1, %s7
  %s10 = scalar_select 0, %s9, %s7
  $region1: #{mixer_forward.1} parent=0
    #allocation2 [shape = 'u8[131072]{0}', space=vmem, size = 0x20000, scoped, tag = 'input window, operand 5, single buffered']
    #allocation3 [shape = 's32[2]{0}', space=sflag, size = 0x8, scoped, tag = 'scoped memory for mixer_forward.1']
    %11 = vsyncpa [#allocation3], 0
    loop: start=0, step=1, limit=4
    $region2: #{mixer_forward.1} parent=1 // loop_pre_header
      _
    $region3: #{mixer_forward.1} parent=1 // loop_header
      %s13 = sphi 0, %s17
      %p14 = scmp.ge.s32.totalorder %s13, 4
      %s23 = sphi 0, %s25
      %s26 = sphi 0, %s23
      %s27 = sphi 0, %s26
      %s43 = sphi 0, %s27
      %s47 = sphi 0, %s47
      %s49 = sphi 0, %s47
      %s50 = sphi 0, %s49
      %s64 = sphi 0, %s50
      %s68 = sphi 0, %s68
      %s70 = sphi 0, %s68
      %s71 = sphi 0, %s70
      %s85 = sphi 0, %s71
      %s89 = sphi 0, %s89
      %s91 = sphi 0, %s89
      %s92 = sphi 0, %s91
      %s106 = sphi 0, %s92
      %s110 = sphi 0, %s110
      %s112 = sphi 0, %s110
      %s113 = sphi 0, %s112
      %s127 = sphi 0, %s113
      %s131 = sphi 0, %s131
      %s133 = sphi 0, %s131
      %s134 = sphi 0, %s133
      %s148 = sphi 0, %s134
      %s154 = sphi 0, %s156
      %s157 = sphi 0, %s154
      %s158 = sphi 0, %s157
      %s174 = sphi 0, %s158
    $region4: #{mixer_forward.1} parent=1 // loop_header_branch
      %16 = sbr.rel (%p14) target = $region8
    $region5: #{mixer_forward.1} parent=1 // loop_body
      %s18 = ssub.s32 %s13, 1
      %s19 = ssub.s32 %s13, 2
      %s20 = sadd.s32 %s13, 1
      %s21 = ssub.s32 %s13, %s20
      %p22 = scmp.eq.s32.totalorder %s21, 0
      %s24 = sadd.s32 %s23, 1
      %s25 = scalar_select %p22, %s23, %s24
      %p28 = pneg %p22
      %p29 = scmp.eq.s32.totalorder %s13, 1
      %p30 = por %p28, %p29
      %p31 = scmp.ne.s32.totalorder %s23, %s26
      %p32 = scmp.eq.s32.totalorder %s13, 0
      %p33 = por %p31, %p32
      %p34 = scmp.ne.s32.totalorder %s23, %s26
      %p35 = scmp.eq.s32.totalorder %s18, 1
      %p36 = por %p34, %p35
      %p37 = scmp.ne.s32.totalorder %s26, %s27
      %p38 = scmp.eq.s32.totalorder %s18, 0
      %p39 = por %p37, %p38
      %p40 = scmp.ne.s32.totalorder %s26, %s27
      %p41 = scmp.eq.s32.totalorder %s19, 1
      %p42 = por %p40, %p41
      %p44 = scmp.ne.s32.totalorder %s27, %s43
      %p45 = scmp.eq.s32.totalorder %s19, 0
      %p46 = por %p44, %p45
      %s48 = sadd.s32 %s47, 1
      %p51 = scmp.eq.s32.totalorder %s13, 1
      %p52 = scmp.ne.s32.totalorder %s47, %s49
      %p53 = scmp.eq.s32.totalorder %s13, 0
      %p54 = por %p52, %p53
      %p55 = scmp.ne.s32.totalorder %s47, %s49
      %p56 = scmp.eq.s32.totalorder %s18, 1
      %p57 = por %p55, %p56
      %p58 = scmp.ne.s32.totalorder %s49, %s50
      %p59 = scmp.eq.s32.totalorder %s18, 0
      %p60 = por %p58, %p59
      %p61 = scmp.ne.s32.totalorder %s49, %s50
      %p62 = scmp.eq.s32.totalorder %s19, 1
      %p63 = por %p61, %p62
      %p65 = scmp.ne.s32.totalorder %s50, %s64
      %p66 = scmp.eq.s32.totalorder %s19, 0
      %p67 = por %p65, %p66
      %s69 = sadd.s32 %s68, 1
      %p72 = scmp.eq.s32.totalorder %s13, 1
      %p73 = scmp.ne.s32.totalorder %s68, %s70
      %p74 = scmp.eq.s32.totalorder %s13, 0
      %p75 = por %p73, %p74
      %p76 = scmp.ne.s32.totalorder %s68, %s70
      %p77 = scmp.eq.s32.totalorder %s18, 1
      %p78 = por %p76, %p77
      %p79 = scmp.ne.s32.totalorder %s70, %s71
      %p80 = scmp.eq.s32.totalorder %s18, 0
      %p81 = por %p79, %p80
      %p82 = scmp.ne.s32.totalorder %s70, %s71
      %p83 = scmp.eq.s32.totalorder %s19, 1
      %p84 = por %p82, %p83
      %p86 = scmp.ne.s32.totalorder %s71, %s85
      %p87 = scmp.eq.s32.totalorder %s19, 0
      %p88 = por %p86, %p87
      %s90 = sadd.s32 %s89, 1
      %p93 = scmp.eq.s32.totalorder %s13, 1
      %p94 = scmp.ne.s32.totalorder %s89, %s91
      %p95 = scmp.eq.s32.totalorder %s13, 0
      %p96 = por %p94, %p95
      %p97 = scmp.ne.s32.totalorder %s89, %s91
      %p98 = scmp.eq.s32.totalorder %s18, 1
      %p99 = por %p97, %p98
      %p100 = scmp.ne.s32.totalorder %s91, %s92
      %p101 = scmp.eq.s32.totalorder %s18, 0
      %p102 = por %p100, %p101
      %p103 = scmp.ne.s32.totalorder %s91, %s92
      %p104 = scmp.eq.s32.totalorder %s19, 1
      %p105 = por %p103, %p104
      %p107 = scmp.ne.s32.totalorder %s92, %s106
      %p108 = scmp.eq.s32.totalorder %s19, 0
      %p109 = por %p107, %p108
      %s111 = sadd.s32 %s110, 1
      %p114 = scmp.eq.s32.totalorder %s13, 1
      %p115 = scmp.ne.s32.totalorder %s110, %s112
      %p116 = scmp.eq.s32.totalorder %s13, 0
      %p117 = por %p115, %p116
      %p118 = scmp.ne.s32.totalorder %s110, %s112
      %p119 = scmp.eq.s32.totalorder %s18, 1
      %p120 = por %p118, %p119
      %p121 = scmp.ne.s32.totalorder %s112, %s113
      %p122 = scmp.eq.s32.totalorder %s18, 0
      %p123 = por %p121, %p122
      %p124 = scmp.ne.s32.totalorder %s112, %s113
      %p125 = scmp.eq.s32.totalorder %s19, 1
      %p126 = por %p124, %p125
      %p128 = scmp.ne.s32.totalorder %s113, %s127
      %p129 = scmp.eq.s32.totalorder %s19, 0
      %p130 = por %p128, %p129
      %s132 = sadd.s32 %s131, 1
      %p135 = scmp.eq.s32.totalorder %s13, 1
      %p136 = scmp.ne.s32.totalorder %s131, %s133
      %p137 = scmp.eq.s32.totalorder %s13, 0
      %p138 = por %p136, %p137
      %p139 = scmp.ne.s32.totalorder %s131, %s133
      %p140 = scmp.eq.s32.totalorder %s18, 1
      %p141 = por %p139, %p140
      %p142 = scmp.ne.s32.totalorder %s133, %s134
      %p143 = scmp.eq.s32.totalorder %s18, 0
      %p144 = por %p142, %p143
      %p145 = scmp.ne.s32.totalorder %s133, %s134
      %p146 = scmp.eq.s32.totalorder %s19, 1
      %p147 = por %p145, %p146
      %p149 = scmp.ne.s32.totalorder %s134, %s148
      %p150 = scmp.eq.s32.totalorder %s19, 0
      %p151 = por %p149, %p150
      %s152 = ssub.s32 %s13, %s20
      %p153 = scmp.eq.s32.totalorder %s152, 0
      %s155 = sadd.s32 %s154, 1
      %s156 = scalar_select %p153, %s154, %s155
      %p159 = pneg %p153
      %p160 = scmp.eq.s32.totalorder %s13, 1
      %p161 = por %p159, %p160
      %p162 = scmp.ne.s32.totalorder %s154, %s157
      %p163 = scmp.eq.s32.totalorder %s13, 0
      %p164 = por %p162, %p163
      %p165 = scmp.ne.s32.totalorder %s154, %s157
      %p166 = scmp.eq.s32.totalorder %s18, 1
      %p167 = por %p165, %p166
      %p168 = scmp.ne.s32.totalorder %s157, %s158
      %p169 = scmp.eq.s32.totalorder %s18, 0
      %p170 = por %p168, %p169
      %p171 = scmp.ne.s32.totalorder %s157, %s158
      %p172 = scmp.eq.s32.totalorder %s19, 1
      %p173 = por %p171, %p172
      %p175 = scmp.ne.s32.totalorder %s158, %s174
      %p176 = scmp.eq.s32.totalorder %s19, 0
      %p177 = por %p175, %p176
      %p178 = scmp.le.s32.totalorder 1, %s13
      %p179 = scmp.lt.s32.totalorder %s13, 3
      %p180 = pnand %p178, %p179
      %p181 = pneg %p180
      // Predicated region
      $region9: #{mixer_forward.1} parent=5 // pred_check
        _
      $region10: #{mixer_forward.1} parent=5 // pred_check_branch
        %183 = sbr.rel (%p180) target = $region12
      $region11: #{mixer_forward.1} parent=5 // pred_region
        %s184 = ssub.s32 %s13, 1
        // Predicated region
        $region13: #{mixer_forward.1} parent=11 // pred_check
          %p185 = pneg %p60
        $region14: #{mixer_forward.1} parent=11 // pred_check_branch
          %187 = sbr.rel (%p185) target = $region16
        $region15: #{mixer_forward.1} parent=11 // pred_region
          _
        $region16: #{mixer_forward.1} parent=11 // pred_fallthru
          _
        // Predicated region
        $region17: #{mixer_forward.1} parent=11 // pred_check
          %p188 = pneg %p81
        $region18: #{mixer_forward.1} parent=11 // pred_check_branch
          %190 = sbr.rel (%p188) target = $region20
        $region19: #{mixer_forward.1} parent=11 // pred_region
          _
        $region20: #{mixer_forward.1} parent=11 // pred_fallthru
          _
        // Predicated region
        $region21: #{mixer_forward.1} parent=11 // pred_check
          %p191 = pneg %p102
        $region22: #{mixer_forward.1} parent=11 // pred_check_branch
          %193 = sbr.rel (%p191) target = $region24
        $region23: #{mixer_forward.1} parent=11 // pred_region
          _
        $region24: #{mixer_forward.1} parent=11 // pred_fallthru
          _
        // Predicated region
        $region25: #{mixer_forward.1} parent=11 // pred_check
          %p194 = pneg %p123
        $region26: #{mixer_forward.1} parent=11 // pred_check_branch
          %196 = sbr.rel (%p194) target = $region28
        $region27: #{mixer_forward.1} parent=11 // pred_region
          _
        $region28: #{mixer_forward.1} parent=11 // pred_fallthru
          _
        // Predicated region
        $region29: #{mixer_forward.1} parent=11 // pred_check
          %p197 = pneg %p144
        $region30: #{mixer_forward.1} parent=11 // pred_check_branch
          %199 = sbr.rel (%p197) target = $region32
        $region31: #{mixer_forward.1} parent=11 // pred_region
          %201 = vsyncadd [#allocation3], 0
          %s202 = sshll.u32 %s5, 4
          %s203 = int_to_ptr.hbm [resolvable:$true] %s202
          %s204 = sshll.u32 [#allocation2], 4
          %s205 = int_to_ptr.vmem [resolvable:$true] %s204
          %210 = dma.hbm_to_vmem [thread:$0]  %s203, 4096, %s205, [#allocation3], 64, 64, 4
        $region32: #{mixer_forward.1} parent=11 // pred_fallthru
          _
      $region12: #{mixer_forward.1} parent=5 // pred_fallthru
        _
      %p211 = scmp.lt.s32.totalorder %s13, 2
      // Predicated region
      $region33: #{mixer_forward.1} parent=5 // pred_check
        %p212 = pneg %p211
      $region34: #{mixer_forward.1} parent=5 // pred_check_branch
        %214 = sbr.rel (%p212) target = $region36
      $region35: #{mixer_forward.1} parent=5 // pred_region
        // Predicated region
        $region37: #{mixer_forward.1} parent=35 // pred_check
          %p215 = pneg %p33
        $region38: #{mixer_forward.1} parent=35 // pred_check_branch
          %217 = sbr.rel (%p215) target = $region40
        $region39: #{mixer_forward.1} parent=35 // pred_region
          %s218 = smul.u32 8, %s13
          %p219 = scmp.lt.s32.totalorder %s218, 15
          %s220 = scalar_select %p219, %s218, 15
          %s221 = smul.addr %s220, 8
          %s222 = scalar_lea.vmem %s0, %s221
          %s223 = smul.u32 8, %s13
        $region40: #{mixer_forward.1} parent=35 // pred_fallthru
          _
      $region36: #{mixer_forward.1} parent=5 // pred_fallthru
        _
      %p224 = scmp.le.s32.totalorder 1, %s13
      %p225 = scmp.lt.s32.totalorder %s13, 3
      %p226 = pnand %p224, %p225
      %p227 = pneg %p226
      // Predicated region
      $region41: #{mixer_forward.1} parent=5 // pred_check
        _
      $region42: #{mixer_forward.1} parent=5 // pred_check_branch
        %229 = sbr.rel (%p226) target = $region44
      $region43: #{mixer_forward.1} parent=5 // pred_region
        %s230 = ssub.s32 %s13, 1
        // Predicated region
        $region45: #{mixer_forward.1} parent=43 // pred_check
          %p231 = pneg %p144
        $region46: #{mixer_forward.1} parent=43 // pred_check_branch
          %233 = sbr.rel (%p231) target = $region48
        $region47: #{mixer_forward.1} parent=43 // pred_region
          %235 = dma.done [#allocation3], 4096
        $region48: #{mixer_forward.1} parent=43 // pred_fallthru
          _
        %s236 = smul.u32 8, %s18
        %p237 = scmp.lt.s32.totalorder %s236, 15
        %s238 = scalar_select %p237, %s236, 15
        %s239 = smul.addr %s238, 8
        %s240 = scalar_lea.vmem %s0, %s239
        %p241 = pneg %p39
        %p242 = pneg %p36
        %p243 = pneg %p60
        %p244 = pneg %p57
        %p245 = pneg %p81
        %p246 = pneg %p78
        %p247 = pneg %p102
        %p248 = pneg %p99
        %p249 = pneg %p123
        %p250 = pneg %p120
        %p251 = pneg %p144
        %p252 = pneg %p141
        %p253 = pneg %p170
        %p254 = pneg %p167
        %s255 = smul.u32 8, %s18
        %p256 = scmp.lt.s32.totalorder %s255, 15
        %s257 = scalar_select %p256, %s255, 15
        %s258 = smul.addr %s257, 8
        %s259 = scalar_lea.vmem %s6, %s258
        %s260 = smul.u32 8, %s18
        %p261 = scmp.lt.s32.totalorder %s260, 15
        %s262 = scalar_select %p261, %s260, 15
        %s263 = smul.addr %s262, 8
        %s264 = scalar_lea.vmem %s0, %s263
        %s265 = smul.u32 8, %s18
        %s266 = smul.u32 8, %s18
        %p267 = scmp.lt.s32.totalorder %s266, 15
        %s268 = scalar_select %p267, %s266, 15
        %s269 = smul.addr %s268, 8
        %s270 = scalar_lea.vmem %s6, %s269
        %s271 = smul.u32 8, %s18
        %v273 = vld [vmem:[%s264] sm:$0xff]
        %v274 = vld [vmem:[%s264 + $0x8] sm:$0xff]
        %v275 = vld [vmem:[%s264 + $0x10] sm:$0xff]
        %v276 = vld [vmem:[%s264 + $0x18] sm:$0xff]
        %v277 = vld [vmem:[%s264 + $0x20] sm:$0xff]
        %v278 = vld [vmem:[%s264 + $0x28] sm:$0xff]
        %v279 = vld [vmem:[%s264 + $0x30] sm:$0xff]
        %v280 = vld [vmem:[%s264 + $0x38] sm:$0xff]
        %v281 = vld [vmem:[%s1] sm:$0x1]
        %v282 = vld [vmem:[%s1 + $0x1] sm:$0x1]
        %283 = vadd.xlane.f32.xlu0 %v273
        %v284 = vpop.xlane.xlu0 %283
        %285 = vadd.xlane.f32.xlu0 %v274
        %v286 = vpop.xlane.xlu0 %285
        %287 = vadd.xlane.f32.xlu0 %v275
        %v288 = vpop.xlane.xlu0 %287
        %289 = vadd.xlane.f32.xlu0 %v276
        %v290 = vpop.xlane.xlu0 %289
        %291 = vadd.xlane.f32.xlu0 %v277
        %v292 = vpop.xlane.xlu0 %291
        %293 = vadd.xlane.f32.xlu0 %v278
        %v294 = vpop.xlane.xlu0 %293
        %295 = vadd.xlane.f32.xlu0 %v279
        %v296 = vpop.xlane.xlu0 %295
        %297 = vadd.xlane.f32.xlu0 %v280
        %v298 = vpop.xlane.xlu0 %297
        %v299 = vrcp.pop 128.0
        %v300 = vmul.f32 128.0, %v299
        %v301 = vsub.f32 1.0, %v300
        %v302 = vmul.f32 %v299, %v301
        %v303 = vadd.f32 %v299, %v302
        %vm304 = vweird.f32 %v299
        %v305 = vsel %vm304, %v299, %v303
        %v306 = vmul.f32 %v284, %v305
        %v307 = vmul.f32 %v286, %v305
        %v308 = vmul.f32 %v288, %v305
        %v309 = vmul.f32 %v290, %v305
        %v310 = vmul.f32 %v292, %v305
        %v311 = vmul.f32 %v294, %v305
        %v312 = vmul.f32 %v296, %v305
        %v313 = vmul.f32 %v298, %v305
        %v314 = vsub.f32 %v273, %v306
        %v315 = vsub.f32 %v274, %v307
        %v316 = vsub.f32 %v275, %v308
        %v317 = vsub.f32 %v276, %v309
        %v318 = vsub.f32 %v277, %v310
        %v319 = vsub.f32 %v278, %v311
        %v320 = vsub.f32 %v279, %v312
        %v321 = vsub.f32 %v280, %v313
        %v322 = vmul.f32 %v314, %v314
        %v323 = vmul.f32 %v315, %v315
        %v324 = vmul.f32 %v316, %v316
        %v325 = vmul.f32 %v317, %v317
        %v326 = vmul.f32 %v318, %v318
        %v327 = vmul.f32 %v319, %v319
        %v328 = vmul.f32 %v320, %v320
        %v329 = vmul.f32 %v321, %v321
        %330 = vadd.xlane.f32.xlu0 %v322
        %v331 = vpop.xlane.xlu0 %330
        %332 = vadd.xlane.f32.xlu0 %v323
        %v333 = vpop.xlane.xlu0 %332
        %334 = vadd.xlane.f32.xlu0 %v324
        %v335 = vpop.xlane.xlu0 %334
        %336 = vadd.xlane.f32.xlu0 %v325
        %v337 = vpop.xlane.xlu0 %336
        %338 = vadd.xlane.f32.xlu0 %v326
        %v339 = vpop.xlane.xlu0 %338
        %340 = vadd.xlane.f32.xlu0 %v327
        %v341 = vpop.xlane.xlu0 %340
        %342 = vadd.xlane.f32.xlu0 %v328
        %v343 = vpop.xlane.xlu0 %342
        %344 = vadd.xlane.f32.xlu0 %v329
        %v345 = vpop.xlane.xlu0 %344
        %v346 = vmul.f32 %v331, %v305
        %v347 = vmul.f32 %v333, %v305
        %v348 = vmul.f32 %v335, %v305
        %v349 = vmul.f32 %v337, %v305
        %v350 = vmul.f32 %v339, %v305
        %v351 = vmul.f32 %v341, %v305
        %v352 = vmul.f32 %v343, %v305
        %v353 = vmul.f32 %v345, %v305
        %v354 = vadd.f32 %v346, 1e-05
        %v355 = vadd.f32 %v347, 1e-05
        %v356 = vadd.f32 %v348, 1e-05
        %v357 = vadd.f32 %v349, 1e-05
        %v358 = vadd.f32 %v350, 1e-05
        %v359 = vadd.f32 %v351, 1e-05
        %v360 = vadd.f32 %v352, 1e-05
        %v361 = vadd.f32 %v353, 1e-05
        %v362 = vrsqrt.pop %v354
        %v363 = vmul.f32 %v362, %v354
        %v364 = vmul.f32 %v363, %v362
        %v365 = vmul.f32 0.5, %v364
        %v366 = vsub.f32 1.5, %v365
        %v367 = vmul.f32 %v362, %v366
        %vm368 = vweird.f32 %v354
        %vm369 = vweird.f32 %v362
        %vm370 = vmor %vm368, %vm369
        %v371 = vsel %vm370, %v362, %v367
        %v372 = vrsqrt.pop %v355
        %v373 = vmul.f32 %v372, %v355
        %v374 = vmul.f32 %v373, %v372
        %v375 = vmul.f32 0.5, %v374
        %v376 = vsub.f32 1.5, %v375
        %v377 = vmul.f32 %v372, %v376
        %vm378 = vweird.f32 %v355
        %vm379 = vweird.f32 %v372
        %vm380 = vmor %vm378, %vm379
        %v381 = vsel %vm380, %v372, %v377
        %v382 = vrsqrt.pop %v356
        %v383 = vmul.f32 %v382, %v356
        %v384 = vmul.f32 %v383, %v382
        %v385 = vmul.f32 0.5, %v384
        %v386 = vsub.f32 1.5, %v385
        %v387 = vmul.f32 %v382, %v386
        %vm388 = vweird.f32 %v356
        %vm389 = vweird.f32 %v382
        %vm390 = vmor %vm388, %vm389
        %v391 = vsel %vm390, %v382, %v387
        %v392 = vrsqrt.pop %v357
        %v393 = vmul.f32 %v392, %v357
        %v394 = vmul.f32 %v393, %v392
        %v395 = vmul.f32 0.5, %v394
        %v396 = vsub.f32 1.5, %v395
        %v397 = vmul.f32 %v392, %v396
        %vm398 = vweird.f32 %v357
        %vm399 = vweird.f32 %v392
        %vm400 = vmor %vm398, %vm399
        %v401 = vsel %vm400, %v392, %v397
        %v402 = vrsqrt.pop %v358
        %v403 = vmul.f32 %v402, %v358
        %v404 = vmul.f32 %v403, %v402
        %v405 = vmul.f32 0.5, %v404
        %v406 = vsub.f32 1.5, %v405
        %v407 = vmul.f32 %v402, %v406
        %vm408 = vweird.f32 %v358
        %vm409 = vweird.f32 %v402
        %vm410 = vmor %vm408, %vm409
        %v411 = vsel %vm410, %v402, %v407
        %v412 = vrsqrt.pop %v359
        %v413 = vmul.f32 %v412, %v359
        %v414 = vmul.f32 %v413, %v412
        %v415 = vmul.f32 0.5, %v414
        %v416 = vsub.f32 1.5, %v415
        %v417 = vmul.f32 %v412, %v416
        %vm418 = vweird.f32 %v359
        %vm419 = vweird.f32 %v412
        %vm420 = vmor %vm418, %vm419
        %v421 = vsel %vm420, %v412, %v417
        %v422 = vrsqrt.pop %v360
        %v423 = vmul.f32 %v422, %v360
        %v424 = vmul.f32 %v423, %v422
        %v425 = vmul.f32 0.5, %v424
        %v426 = vsub.f32 1.5, %v425
        %v427 = vmul.f32 %v422, %v426
        %vm428 = vweird.f32 %v360
        %vm429 = vweird.f32 %v422
        %vm430 = vmor %vm428, %vm429
        %v431 = vsel %vm430, %v422, %v427
        %v432 = vrsqrt.pop %v361
        %v433 = vmul.f32 %v432, %v361
        %v434 = vmul.f32 %v433, %v432
        %v435 = vmul.f32 0.5, %v434
        %v436 = vsub.f32 1.5, %v435
        %v437 = vmul.f32 %v432, %v436
        %vm438 = vweird.f32 %v361
        %vm439 = vweird.f32 %v432
        %vm440 = vmor %vm438, %vm439
        %v441 = vsel %vm440, %v432, %v437
        %v442 = vmul.f32 %v314, %v371
        %v443 = vmul.f32 %v315, %v381
        %v444 = vmul.f32 %v316, %v391
        %v445 = vmul.f32 %v317, %v401
        %v446 = vmul.f32 %v318, %v411
        %v447 = vmul.f32 %v319, %v421
        %v448 = vmul.f32 %v320, %v431
        %v449 = vmul.f32 %v321, %v441
        %v450 = vperm.slane %v281, 0
        %v451 = vmul.f32 %v442, %v450
        %v452 = vmul.f32 %v443, %v450
        %v453 = vmul.f32 %v444, %v450
        %v454 = vmul.f32 %v445, %v450
        %v455 = vmul.f32 %v446, %v450
        %v456 = vmul.f32 %v447, %v450
        %v457 = vmul.f32 %v448, %v450
        %v458 = vmul.f32 %v449, %v450
        %v459 = vperm.slane %v282, 0
        %v460 = vadd.f32 %v451, %v459
        %v461 = vadd.f32 %v452, %v459
        %v462 = vadd.f32 %v453, %v459
        %v463 = vadd.f32 %v454, %v459
        %v464 = vadd.f32 %v455, %v459
        %v465 = vadd.f32 %v456, %v459
        %v466 = vadd.f32 %v457, %v459
        %v467 = vadd.f32 %v458, %v459
        %v468 = vpack.c.bf16 %v460, %v460
        %v469 = vpack.c.bf16 %v461, %v461
        %v470 = vpack.c.bf16 %v462, %v462
        %v471 = vpack.c.bf16 %v463, %v463
        %v472 = vpack.c.bf16 %v464, %v464
        %v473 = vpack.c.bf16 %v465, %v465
        %v474 = vpack.c.bf16 %v466, %v466
        %v475 = vpack.c.bf16 %v467, %v467
        %v476 = vld [vmem:[%s2] sm:$0xf]
        %v477 = vld [vmem:[%s2 + $0x4] sm:$0xf]
        %v478 = vld [vmem:[%s2 + $0x8] sm:$0xf]
        %v479 = vld [vmem:[%s2 + $0xc] sm:$0xf]
        %v484 = vunpack.c.l.b16 %v476
        %v485 = vunpack.c.l.b16 %v477
        %v486 = vunpack.c.l.b16 %v478
        %v487 = vunpack.c.l.b16 %v479
        %v488 = vpack.c.b16 %v485, %v484
        %v489 = vpack.c.b16 %v487, %v486
        %vm490 = vcmask 64512
        %v492 = vsel %vm490, %v488, 0
        %v495 = vsel %vm490, %v489, 0
        %vm497 = vcmask 1043456
        %v499 = vsel %vm497, %v468, 0
        %501 = vmatpush.bf16.msra.mxu0 0
        %502 = vmatpush.bf16.msra.mxu0 0
        %503 = vmatpush.bf16.msra.mxu0 0
        %504 = vmatpush.bf16.msra.mxu0 0
        %505 = vmatpush.bf16.msra.mxu0 0
        %506 = vmatpush.bf16.msra.mxu0 0
        %507 = vmatpush.bf16.msra.mxu0 0
        %508 = vmatpush.bf16.msra.mxu0 %v499
        %509 = vmatmul.bf16.gmra.mxu0 %v492
        %v510 = vpop.f32.mrf.mxu0
        %v511 = vadd.f32 0.0, %v510
        %v512 = vpop.f32.mrf.mxu0
        %v513 = vadd.f32 0.0, %v512
        %514 = vmatmul.bf16.gmra.mxu0 %v495
        %v515 = vpop.f32.mrf.mxu0
        %v516 = vadd.f32 0.0, %v515
        %v517 = vpop.f32.mrf.mxu0
        %v518 = vadd.f32 0.0, %v517
        %519 = vdwg.mxu0
        %v521 = vsel %vm497, %v469, 0
        %523 = vmatpush.bf16.msra.mxu0 0
        %524 = vmatpush.bf16.msra.mxu0 0
        %525 = vmatpush.bf16.msra.mxu0 0
        %526 = vmatpush.bf16.msra.mxu0 0
        %527 = vmatpush.bf16.msra.mxu0 0
        %528 = vmatpush.bf16.msra.mxu0 0
        %529 = vmatpush.bf16.msra.mxu0 0
        %530 = vmatpush.bf16.msra.mxu0 %v521
        %531 = vmatmul.bf16.gmra.mxu0 %v492
        %v532 = vpop.f32.mrf.mxu0
        %v533 = vadd.f32 0.0, %v532
        %v534 = vpop.f32.mrf.mxu0
        %v535 = vadd.f32 0.0, %v534
        %536 = vmatmul.bf16.gmra.mxu0 %v495
        %v537 = vpop.f32.mrf.mxu0
        %v538 = vadd.f32 0.0, %v537
        %v539 = vpop.f32.mrf.mxu0
        %v540 = vadd.f32 0.0, %v539
        %541 = vdwg.mxu0
        %v543 = vsel %vm497, %v470, 0
        %545 = vmatpush.bf16.msra.mxu0 0
        %546 = vmatpush.bf16.msra.mxu0 0
        %547 = vmatpush.bf16.msra.mxu0 0
        %548 = vmatpush.bf16.msra.mxu0 0
        %549 = vmatpush.bf16.msra.mxu0 0
        %550 = vmatpush.bf16.msra.mxu0 0
        %551 = vmatpush.bf16.msra.mxu0 0
        %552 = vmatpush.bf16.msra.mxu0 %v543
        %553 = vmatmul.bf16.gmra.mxu0 %v492
        %v554 = vpop.f32.mrf.mxu0
        %v555 = vadd.f32 0.0, %v554
        %v556 = vpop.f32.mrf.mxu0
        %v557 = vadd.f32 0.0, %v556
        %558 = vmatmul.bf16.gmra.mxu0 %v495
        %v559 = vpop.f32.mrf.mxu0
        %v560 = vadd.f32 0.0, %v559
        %v561 = vpop.f32.mrf.mxu0
        %v562 = vadd.f32 0.0, %v561
        %563 = vdwg.mxu0
        %v565 = vsel %vm497, %v471, 0
        %567 = vmatpush.bf16.msra.mxu0 0
        %568 = vmatpush.bf16.msra.mxu0 0
        %569 = vmatpush.bf16.msra.mxu0 0
        %570 = vmatpush.bf16.msra.mxu0 0
        %571 = vmatpush.bf16.msra.mxu0 0
        %572 = vmatpush.bf16.msra.mxu0 0
        %573 = vmatpush.bf16.msra.mxu0 0
        %574 = vmatpush.bf16.msra.mxu0 %v565
        %575 = vmatmul.bf16.gmra.mxu0 %v492
        %v576 = vpop.f32.mrf.mxu0
        %v577 = vadd.f32 0.0, %v576
        %v578 = vpop.f32.mrf.mxu0
        %v579 = vadd.f32 0.0, %v578
        %580 = vmatmul.bf16.gmra.mxu0 %v495
        %v581 = vpop.f32.mrf.mxu0
        %v582 = vadd.f32 0.0, %v581
        %v583 = vpop.f32.mrf.mxu0
        %v584 = vadd.f32 0.0, %v583
        %585 = vdwg.mxu0
        %v587 = vsel %vm497, %v472, 0
        %589 = vmatpush.bf16.msra.mxu0 0
        %590 = vmatpush.bf16.msra.mxu0 0
        %591 = vmatpush.bf16.msra.mxu0 0
        %592 = vmatpush.bf16.msra.mxu0 0
        %593 = vmatpush.bf16.msra.mxu0 0
        %594 = vmatpush.bf16.msra.mxu0 0
        %595 = vmatpush.bf16.msra.mxu0 0
        %596 = vmatpush.bf16.msra.mxu0 %v587
        %597 = vmatmul.bf16.gmra.mxu0 %v492
        %v598 = vpop.f32.mrf.mxu0
        %v599 = vadd.f32 0.0, %v598
        %v600 = vpop.f32.mrf.mxu0
        %v601 = vadd.f32 0.0, %v600
        %602 = vmatmul.bf16.gmra.mxu0 %v495
        %v603 = vpop.f32.mrf.mxu0
        %v604 = vadd.f32 0.0, %v603
        %v605 = vpop.f32.mrf.mxu0
        %v606 = vadd.f32 0.0, %v605
        %607 = vdwg.mxu0
        %v609 = vsel %vm497, %v473, 0
        %611 = vmatpush.bf16.msra.mxu0 0
        %612 = vmatpush.bf16.msra.mxu0 0
        %613 = vmatpush.bf16.msra.mxu0 0
        %614 = vmatpush.bf16.msra.mxu0 0
        %615 = vmatpush.bf16.msra.mxu0 0
        %616 = vmatpush.bf16.msra.mxu0 0
        %617 = vmatpush.bf16.msra.mxu0 0
        %618 = vmatpush.bf16.msra.mxu0 %v609
        %619 = vmatmul.bf16.gmra.mxu0 %v492
        %v620 = vpop.f32.mrf.mxu0
        %v621 = vadd.f32 0.0, %v620
        %v622 = vpop.f32.mrf.mxu0
        %v623 = vadd.f32 0.0, %v622
        %624 = vmatmul.bf16.gmra.mxu0 %v495
        %v625 = vpop.f32.mrf.mxu0
        %v626 = vadd.f32 0.0, %v625
        %v627 = vpop.f32.mrf.mxu0
        %v628 = vadd.f32 0.0, %v627
        %629 = vdwg.mxu0
        %v631 = vsel %vm497, %v474, 0
        %633 = vmatpush.bf16.msra.mxu0 0
        %634 = vmatpush.bf16.msra.mxu0 0
        %635 = vmatpush.bf16.msra.mxu0 0
        %636 = vmatpush.bf16.msra.mxu0 0
        %637 = vmatpush.bf16.msra.mxu0 0
        %638 = vmatpush.bf16.msra.mxu0 0
        %639 = vmatpush.bf16.msra.mxu0 0
        %640 = vmatpush.bf16.msra.mxu0 %v631
        %641 = vmatmul.bf16.gmra.mxu0 %v492
        %v642 = vpop.f32.mrf.mxu0
        %v643 = vadd.f32 0.0, %v642
        %v644 = vpop.f32.mrf.mxu0
        %v645 = vadd.f32 0.0, %v644
        %646 = vmatmul.bf16.gmra.mxu0 %v495
        %v647 = vpop.f32.mrf.mxu0
        %v648 = vadd.f32 0.0, %v647
        %v649 = vpop.f32.mrf.mxu0
        %v650 = vadd.f32 0.0, %v649
        %651 = vdwg.mxu0
        %v653 = vsel %vm497, %v475, 0
        %655 = vmatpush.bf16.msra.mxu0 0
        %656 = vmatpush.bf16.msra.mxu0 0
        %657 = vmatpush.bf16.msra.mxu0 0
        %658 = vmatpush.bf16.msra.mxu0 0
        %659 = vmatpush.bf16.msra.mxu0 0
        %660 = vmatpush.bf16.msra.mxu0 0
        %661 = vmatpush.bf16.msra.mxu0 0
        %662 = vmatpush.bf16.msra.mxu0 %v653
        %663 = vmatmul.bf16.gmra.mxu0 %v492
        %v664 = vpop.f32.mrf.mxu0
        %v665 = vadd.f32 0.0, %v664
        %v666 = vpop.f32.mrf.mxu0
        %v667 = vadd.f32 0.0, %v666
        %668 = vmatmul.bf16.gmra.mxu0 %v495
        %v669 = vpop.f32.mrf.mxu0
        %v670 = vadd.f32 0.0, %v669
        %v671 = vpop.f32.mrf.mxu0
        %v672 = vadd.f32 0.0, %v671
        %673 = vdwg.mxu0
        %v674 = vmul.f32 %v511, 0.5
        %v675 = vmul.f32 %v513, 0.5
        %v676 = vmul.f32 %v516, 0.5
        %v677 = vmul.f32 %v518, 0.5
        %v678 = vmul.f32 %v533, 0.5
        %v679 = vmul.f32 %v535, 0.5
        %v680 = vmul.f32 %v538, 0.5
        %v681 = vmul.f32 %v540, 0.5
        %v682 = vmul.f32 %v555, 0.5
        %v683 = vmul.f32 %v557, 0.5
        %v684 = vmul.f32 %v560, 0.5
        %v685 = vmul.f32 %v562, 0.5
        %v686 = vmul.f32 %v577, 0.5
        %v687 = vmul.f32 %v579, 0.5
        %v688 = vmul.f32 %v582, 0.5
        %v689 = vmul.f32 %v584, 0.5
        %v690 = vmul.f32 %v599, 0.5
        %v691 = vmul.f32 %v601, 0.5
        %v692 = vmul.f32 %v604, 0.5
        %v693 = vmul.f32 %v606, 0.5
        %v694 = vmul.f32 %v621, 0.5
        %v695 = vmul.f32 %v623, 0.5
        %v696 = vmul.f32 %v626, 0.5
        %v697 = vmul.f32 %v628, 0.5
        %v698 = vmul.f32 %v643, 0.5
        %v699 = vmul.f32 %v645, 0.5
        %v700 = vmul.f32 %v648, 0.5
        %v701 = vmul.f32 %v650, 0.5
        %v702 = vmul.f32 %v665, 0.5
        %v703 = vmul.f32 %v667, 0.5
        %v704 = vmul.f32 %v670, 0.5
        %v705 = vmul.f32 %v672, 0.5
        %v706 = vmul.f32 %v511, 0.044715
        %v707 = vmul.f32 %v513, 0.044715
        %v708 = vmul.f32 %v516, 0.044715
        %v709 = vmul.f32 %v518, 0.044715
        %v710 = vmul.f32 %v533, 0.044715
        %v711 = vmul.f32 %v535, 0.044715
        %v712 = vmul.f32 %v538, 0.044715
        %v713 = vmul.f32 %v540, 0.044715
        %v714 = vmul.f32 %v555, 0.044715
        %v715 = vmul.f32 %v557, 0.044715
        %v716 = vmul.f32 %v560, 0.044715
        %v717 = vmul.f32 %v562, 0.044715
        %v718 = vmul.f32 %v577, 0.044715
        %v719 = vmul.f32 %v579, 0.044715
        %v720 = vmul.f32 %v582, 0.044715
        %v721 = vmul.f32 %v584, 0.044715
        %v722 = vmul.f32 %v599, 0.044715
        %v723 = vmul.f32 %v601, 0.044715
        %v724 = vmul.f32 %v604, 0.044715
        %v725 = vmul.f32 %v606, 0.044715
        %v726 = vmul.f32 %v621, 0.044715
        %v727 = vmul.f32 %v623, 0.044715
        %v728 = vmul.f32 %v626, 0.044715
        %v729 = vmul.f32 %v628, 0.044715
        %v730 = vmul.f32 %v643, 0.044715
        %v731 = vmul.f32 %v645, 0.044715
        %v732 = vmul.f32 %v648, 0.044715
        %v733 = vmul.f32 %v650, 0.044715
        %v734 = vmul.f32 %v665, 0.044715
        %v735 = vmul.f32 %v667, 0.044715
        %v736 = vmul.f32 %v670, 0.044715
        %v737 = vmul.f32 %v672, 0.044715
        %v738 = vmul.f32 %v706, %v511
        %v739 = vmul.f32 %v707, %v513
        %v740 = vmul.f32 %v708, %v516
        %v741 = vmul.f32 %v709, %v518
        %v742 = vmul.f32 %v710, %v533
        %v743 = vmul.f32 %v711, %v535
        %v744 = vmul.f32 %v712, %v538
        %v745 = vmul.f32 %v713, %v540
        %v746 = vmul.f32 %v714, %v555
        %v747 = vmul.f32 %v715, %v557
        %v748 = vmul.f32 %v716, %v560
        %v749 = vmul.f32 %v717, %v562
        %v750 = vmul.f32 %v718, %v577
        %v751 = vmul.f32 %v719, %v579
        %v752 = vmul.f32 %v720, %v582
        %v753 = vmul.f32 %v721, %v584
        %v754 = vmul.f32 %v722, %v599
        %v755 = vmul.f32 %v723, %v601
        %v756 = vmul.f32 %v724, %v604
        %v757 = vmul.f32 %v725, %v606
        %v758 = vmul.f32 %v726, %v621
        %v759 = vmul.f32 %v727, %v623
        %v760 = vmul.f32 %v728, %v626
        %v761 = vmul.f32 %v729, %v628
        %v762 = vmul.f32 %v730, %v643
        %v763 = vmul.f32 %v731, %v645
        %v764 = vmul.f32 %v732, %v648
        %v765 = vmul.f32 %v733, %v650
        %v766 = vmul.f32 %v734, %v665
        %v767 = vmul.f32 %v735, %v667
        %v768 = vmul.f32 %v736, %v670
        %v769 = vmul.f32 %v737, %v672
        %v770 = vmul.f32 %v738, %v511
        %v771 = vmul.f32 %v739, %v513
        %v772 = vmul.f32 %v740, %v516
        %v773 = vmul.f32 %v741, %v518
        %v774 = vmul.f32 %v742, %v533
        %v775 = vmul.f32 %v743, %v535
        %v776 = vmul.f32 %v744, %v538
        %v777 = vmul.f32 %v745, %v540
        %v778 = vmul.f32 %v746, %v555
        %v779 = vmul.f32 %v747, %v557
        %v780 = vmul.f32 %v748, %v560
        %v781 = vmul.f32 %v749, %v562
        %v782 = vmul.f32 %v750, %v577
        %v783 = vmul.f32 %v751, %v579
        %v784 = vmul.f32 %v752, %v582
        %v785 = vmul.f32 %v753, %v584
        %v786 = vmul.f32 %v754, %v599
        %v787 = vmul.f32 %v755, %v601
        %v788 = vmul.f32 %v756, %v604
        %v789 = vmul.f32 %v757, %v606
        %v790 = vmul.f32 %v758, %v621
        %v791 = vmul.f32 %v759, %v623
        %v792 = vmul.f32 %v760, %v626
        %v793 = vmul.f32 %v761, %v628
        %v794 = vmul.f32 %v762, %v643
        %v795 = vmul.f32 %v763, %v645
        %v796 = vmul.f32 %v764, %v648
        %v797 = vmul.f32 %v765, %v650
        %v798 = vmul.f32 %v766, %v665
        %v799 = vmul.f32 %v767, %v667
        %v800 = vmul.f32 %v768, %v670
        %v801 = vmul.f32 %v769, %v672
        %v802 = vadd.f32 %v511, %v770
        %v803 = vadd.f32 %v513, %v771
        %v804 = vadd.f32 %v516, %v772
        %v805 = vadd.f32 %v518, %v773
        %v806 = vadd.f32 %v533, %v774
        %v807 = vadd.f32 %v535, %v775
        %v808 = vadd.f32 %v538, %v776
        %v809 = vadd.f32 %v540, %v777
        %v810 = vadd.f32 %v555, %v778
        %v811 = vadd.f32 %v557, %v779
        %v812 = vadd.f32 %v560, %v780
        %v813 = vadd.f32 %v562, %v781
        %v814 = vadd.f32 %v577, %v782
        %v815 = vadd.f32 %v579, %v783
        %v816 = vadd.f32 %v582, %v784
        %v817 = vadd.f32 %v584, %v785
        %v818 = vadd.f32 %v599, %v786
        %v819 = vadd.f32 %v601, %v787
        %v820 = vadd.f32 %v604, %v788
        %v821 = vadd.f32 %v606, %v789
        %v822 = vadd.f32 %v621, %v790
        %v823 = vadd.f32 %v623, %v791
        %v824 = vadd.f32 %v626, %v792
        %v825 = vadd.f32 %v628, %v793
        %v826 = vadd.f32 %v643, %v794
        %v827 = vadd.f32 %v645, %v795
        %v828 = vadd.f32 %v648, %v796
        %v829 = vadd.f32 %v650, %v797
        %v830 = vadd.f32 %v665, %v798
        %v831 = vadd.f32 %v667, %v799
        %v832 = vadd.f32 %v670, %v800
        %v833 = vadd.f32 %v672, %v801
        %v834 = vmul.f32 %v802, 0.7978846
        %v835 = vmul.f32 %v803, 0.7978846
        %v836 = vmul.f32 %v804, 0.7978846
        %v837 = vmul.f32 %v805, 0.7978846
        %v838 = vmul.f32 %v806, 0.7978846
        %v839 = vmul.f32 %v807, 0.7978846
        %v840 = vmul.f32 %v808, 0.7978846
        %v841 = vmul.f32 %v809, 0.7978846
        %v842 = vmul.f32 %v810, 0.7978846
        %v843 = vmul.f32 %v811, 0.7978846
        %v844 = vmul.f32 %v812, 0.7978846
        %v845 = vmul.f32 %v813, 0.7978846
        %v846 = vmul.f32 %v814, 0.7978846
        %v847 = vmul.f32 %v815, 0.7978846
        %v848 = vmul.f32 %v816, 0.7978846
        %v849 = vmul.f32 %v817, 0.7978846
        %v850 = vmul.f32 %v818, 0.7978846
        %v851 = vmul.f32 %v819, 0.7978846
        %v852 = vmul.f32 %v820, 0.7978846
        %v853 = vmul.f32 %v821, 0.7978846
        %v854 = vmul.f32 %v822, 0.7978846
        %v855 = vmul.f32 %v823, 0.7978846
        %v856 = vmul.f32 %v824, 0.7978846
        %v857 = vmul.f32 %v825, 0.7978846
        %v858 = vmul.f32 %v826, 0.7978846
        %v859 = vmul.f32 %v827, 0.7978846
        %v860 = vmul.f32 %v828, 0.7978846
        %v861 = vmul.f32 %v829, 0.7978846
        %v862 = vmul.f32 %v830, 0.7978846
        %v863 = vmul.f32 %v831, 0.7978846
        %v864 = vmul.f32 %v832, 0.7978846
        %v865 = vmul.f32 %v833, 0.7978846
        %v866 = vtanh.pop %v834
        %v867 = vtanh.pop %v835
        %v868 = vtanh.pop %v836
        %v869 = vtanh.pop %v837
        %v870 = vtanh.pop %v838
        %v871 = vtanh.pop %v839
        %v872 = vtanh.pop %v840
        %v873 = vtanh.pop %v841
        %v874 = vtanh.pop %v842
        %v875 = vtanh.pop %v843
        %v876 = vtanh.pop %v844
        %v877 = vtanh.pop %v845
        %v878 = vtanh.pop %v846
        %v879 = vtanh.pop %v847
        %v880 = vtanh.pop %v848
        %v881 = vtanh.pop %v849
        %v882 = vtanh.pop %v850
        %v883 = vtanh.pop %v851
        %v884 = vtanh.pop %v852
        %v885 = vtanh.pop %v853
        %v886 = vtanh.pop %v854
        %v887 = vtanh.pop %v855
        %v888 = vtanh.pop %v856
        %v889 = vtanh.pop %v857
        %v890 = vtanh.pop %v858
        %v891 = vtanh.pop %v859
        %v892 = vtanh.pop %v860
        %v893 = vtanh.pop %v861
        %v894 = vtanh.pop %v862
        %v895 = vtanh.pop %v863
        %v896 = vtanh.pop %v864
        %v897 = vtanh.pop %v865
        %v898 = vadd.f32 %v866, 1.0
        %v899 = vadd.f32 %v867, 1.0
        %v900 = vadd.f32 %v868, 1.0
        %v901 = vadd.f32 %v869, 1.0
        %v902 = vadd.f32 %v870, 1.0
        %v903 = vadd.f32 %v871, 1.0
        %v904 = vadd.f32 %v872, 1.0
        %v905 = vadd.f32 %v873, 1.0
        %v906 = vadd.f32 %v874, 1.0
        %v907 = vadd.f32 %v875, 1.0
        %v908 = vadd.f32 %v876, 1.0
        %v909 = vadd.f32 %v877, 1.0
        %v910 = vadd.f32 %v878, 1.0
        %v911 = vadd.f32 %v879, 1.0
        %v912 = vadd.f32 %v880, 1.0
        %v913 = vadd.f32 %v881, 1.0
        %v914 = vadd.f32 %v882, 1.0
        %v915 = vadd.f32 %v883, 1.0
        %v916 = vadd.f32 %v884, 1.0
        %v917 = vadd.f32 %v885, 1.0
        %v918 = vadd.f32 %v886, 1.0
        %v919 = vadd.f32 %v887, 1.0
        %v920 = vadd.f32 %v888, 1.0
        %v921 = vadd.f32 %v889, 1.0
        %v922 = vadd.f32 %v890, 1.0
        %v923 = vadd.f32 %v891, 1.0
        %v924 = vadd.f32 %v892, 1.0
        %v925 = vadd.f32 %v893, 1.0
        %v926 = vadd.f32 %v894, 1.0
        %v927 = vadd.f32 %v895, 1.0
        %v928 = vadd.f32 %v896, 1.0
        %v929 = vadd.f32 %v897, 1.0
        %v930 = vmul.f32 %v674, %v898
        %v931 = vmul.f32 %v675, %v899
        %v932 = vmul.f32 %v676, %v900
        %v933 = vmul.f32 %v677, %v901
        %v934 = vmul.f32 %v678, %v902
        %v935 = vmul.f32 %v679, %v903
        %v936 = vmul.f32 %v680, %v904
        %v937 = vmul.f32 %v681, %v905
        %v938 = vmul.f32 %v682, %v906
        %v939 = vmul.f32 %v683, %v907
        %v940 = vmul.f32 %v684, %v908
        %v941 = vmul.f32 %v685, %v909
        %v942 = vmul.f32 %v686, %v910
        %v943 = vmul.f32 %v687, %v911
        %v944 = vmul.f32 %v688, %v912
        %v945 = vmul.f32 %v689, %v913
        %v946 = vmul.f32 %v690, %v914
        %v947 = vmul.f32 %v691, %v915
        %v948 = vmul.f32 %v692, %v916
        %v949 = vmul.f32 %v693, %v917
        %v950 = vmul.f32 %v694, %v918
        %v951 = vmul.f32 %v695, %v919
        %v952 = vmul.f32 %v696, %v920
        %v953 = vmul.f32 %v697, %v921
        %v954 = vmul.f32 %v698, %v922
        %v955 = vmul.f32 %v699, %v923
        %v956 = vmul.f32 %v700, %v924
        %v957 = vmul.f32 %v701, %v925
        %v958 = vmul.f32 %v702, %v926
        %v959 = vmul.f32 %v703, %v927
        %v960 = vmul.f32 %v704, %v928
        %v961 = vmul.f32 %v705, %v929
        %v962 = vpack.c.bf16 %v930, %v930
        %v963 = vpack.c.bf16 %v931, %v931
        %v964 = vpack.c.bf16 %v932, %v932
        %v965 = vpack.c.bf16 %v933, %v933
        %v966 = vpack.c.bf16 %v934, %v934
        %v967 = vpack.c.bf16 %v935, %v935
        %v968 = vpack.c.bf16 %v936, %v936
        %v969 = vpack.c.bf16 %v937, %v937
        %v970 = vpack.c.bf16 %v938, %v938
        %v971 = vpack.c.bf16 %v939, %v939
        %v972 = vpack.c.bf16 %v940, %v940
        %v973 = vpack.c.bf16 %v941, %v941
        %v974 = vpack.c.bf16 %v942, %v942
        %v975 = vpack.c.bf16 %v943, %v943
        %v976 = vpack.c.bf16 %v944, %v944
        %v977 = vpack.c.bf16 %v945, %v945
        %v978 = vpack.c.bf16 %v946, %v946
        %v979 = vpack.c.bf16 %v947, %v947
        %v980 = vpack.c.bf16 %v948, %v948
        %v981 = vpack.c.bf16 %v949, %v949
        %v982 = vpack.c.bf16 %v950, %v950
        %v983 = vpack.c.bf16 %v951, %v951
        %v984 = vpack.c.bf16 %v952, %v952
        %v985 = vpack.c.bf16 %v953, %v953
        %v986 = vpack.c.bf16 %v954, %v954
        %v987 = vpack.c.bf16 %v955, %v955
        %v988 = vpack.c.bf16 %v956, %v956
        %v989 = vpack.c.bf16 %v957, %v957
        %v990 = vpack.c.bf16 %v958, %v958
        %v991 = vpack.c.bf16 %v959, %v959
        %v992 = vpack.c.bf16 %v960, %v960
        %v993 = vpack.c.bf16 %v961, %v961
        %v994 = vld [vmem:[%s3] sm:$0xf]
        %v999 = vunpack.c.l.b16 %v962
        %v1000 = vunpack.c.l.b16 %v963
        %v1001 = vunpack.c.l.b16 %v964
        %v1002 = vunpack.c.l.b16 %v965
        %v1003 = vpack.c.b16 %v1000, %v999
        %v1004 = vpack.c.b16 %v1002, %v1001
        %vm1007 = vcmask 261120
        %v1009 = vsel %vm1007, %v994, 0
        %1011 = vmatpush.bf16.msra.mxu0 0
        %1012 = vmatpush.bf16.msra.mxu0 0
        %1013 = vmatpush.bf16.msra.mxu0 0
        %1014 = vmatpush.bf16.msra.mxu0 0
        %1015 = vmatpush.bf16.msra.mxu0 0
        %1016 = vmatpush.bf16.msra.mxu0 0
        %1017 = vmatpush.bf16.msra.mxu0 %v1004
        %1018 = vmatpush.bf16.msra.mxu0 %v1003
        %1019 = vmatmul.bf16.gmra.mxu0 %v1009
        %v1020 = vpop.f32.mrf.mxu0
        %v1021 = vadd.f32 %v273, %v1020
        %v1022 = vpop.f32.mrf.mxu0
        %1023 = vdwg.mxu0
        %v1028 = vunpack.c.l.b16 %v966
        %v1029 = vunpack.c.l.b16 %v967
        %v1030 = vunpack.c.l.b16 %v968
        %v1031 = vunpack.c.l.b16 %v969
        %v1032 = vpack.c.b16 %v1029, %v1028
        %v1033 = vpack.c.b16 %v1031, %v1030
        %1036 = vmatpush.bf16.msra.mxu0 0
        %1037 = vmatpush.bf16.msra.mxu0 0
        %1038 = vmatpush.bf16.msra.mxu0 0
        %1039 = vmatpush.bf16.msra.mxu0 0
        %1040 = vmatpush.bf16.msra.mxu0 0
        %1041 = vmatpush.bf16.msra.mxu0 0
        %1042 = vmatpush.bf16.msra.mxu0 %v1033
        %1043 = vmatpush.bf16.msra.mxu0 %v1032
        %1044 = vmatmul.bf16.gmra.mxu0 %v1009
        %v1045 = vpop.f32.mrf.mxu0
        %v1046 = vadd.f32 %v274, %v1045
        %v1047 = vpop.f32.mrf.mxu0
        %1048 = vdwg.mxu0
        %v1053 = vunpack.c.l.b16 %v970
        %v1054 = vunpack.c.l.b16 %v971
        %v1055 = vunpack.c.l.b16 %v972
        %v1056 = vunpack.c.l.b16 %v973
        %v1057 = vpack.c.b16 %v1054, %v1053
        %v1058 = vpack.c.b16 %v1056, %v1055
        %1061 = vmatpush.bf16.msra.mxu0 0
        %1062 = vmatpush.bf16.msra.mxu0 0
        %1063 = vmatpush.bf16.msra.mxu0 0
        %1064 = vmatpush.bf16.msra.mxu0 0
        %1065 = vmatpush.bf16.msra.mxu0 0
        %1066 = vmatpush.bf16.msra.mxu0 0
        %1067 = vmatpush.bf16.msra.mxu0 %v1058
        %1068 = vmatpush.bf16.msra.mxu0 %v1057
        %1069 = vmatmul.bf16.gmra.mxu0 %v1009
        %v1070 = vpop.f32.mrf.mxu0
        %v1071 = vadd.f32 %v275, %v1070
        %v1072 = vpop.f32.mrf.mxu0
        %1073 = vdwg.mxu0
        %v1078 = vunpack.c.l.b16 %v974
        %v1079 = vunpack.c.l.b16 %v975
        %v1080 = vunpack.c.l.b16 %v976
        %v1081 = vunpack.c.l.b16 %v977
        %v1082 = vpack.c.b16 %v1079, %v1078
        %v1083 = vpack.c.b16 %v1081, %v1080
        %1086 = vmatpush.bf16.msra.mxu0 0
        %1087 = vmatpush.bf16.msra.mxu0 0
        %1088 = vmatpush.bf16.msra.mxu0 0
        %1089 = vmatpush.bf16.msra.mxu0 0
        %1090 = vmatpush.bf16.msra.mxu0 0
        %1091 = vmatpush.bf16.msra.mxu0 0
        %1092 = vmatpush.bf16.msra.mxu0 %v1083
        %1093 = vmatpush.bf16.msra.mxu0 %v1082
        %1094 = vmatmul.bf16.gmra.mxu0 %v1009
        %v1095 = vpop.f32.mrf.mxu0
        %v1096 = vadd.f32 %v276, %v1095
        %v1097 = vpop.f32.mrf.mxu0
        %1098 = vdwg.mxu0
        %v1103 = vunpack.c.l.b16 %v978
        %v1104 = vunpack.c.l.b16 %v979
        %v1105 = vunpack.c.l.b16 %v980
        %v1106 = vunpack.c.l.b16 %v981
        %v1107 = vpack.c.b16 %v1104, %v1103
        %v1108 = vpack.c.b16 %v1106, %v1105
        %1111 = vmatpush.bf16.msra.mxu0 0
        %1112 = vmatpush.bf16.msra.mxu0 0
        %1113 = vmatpush.bf16.msra.mxu0 0
        %1114 = vmatpush.bf16.msra.mxu0 0
        %1115 = vmatpush.bf16.msra.mxu0 0
        %1116 = vmatpush.bf16.msra.mxu0 0
        %1117 = vmatpush.bf16.msra.mxu0 %v1108
        %1118 = vmatpush.bf16.msra.mxu0 %v1107
        %1119 = vmatmul.bf16.gmra.mxu0 %v1009
        %v1120 = vpop.f32.mrf.mxu0
        %v1121 = vadd.f32 %v277, %v1120
        %v1122 = vpop.f32.mrf.mxu0
        %1123 = vdwg.mxu0
        %v1128 = vunpack.c.l.b16 %v982
        %v1129 = vunpack.c.l.b16 %v983
        %v1130 = vunpack.c.l.b16 %v984
        %v1131 = vunpack.c.l.b16 %v985
        %v1132 = vpack.c.b16 %v1129, %v1128
        %v1133 = vpack.c.b16 %v1131, %v1130
        %1136 = vmatpush.bf16.msra.mxu0 0
        %1137 = vmatpush.bf16.msra.mxu0 0
        %1138 = vmatpush.bf16.msra.mxu0 0
        %1139 = vmatpush.bf16.msra.mxu0 0
        %1140 = vmatpush.bf16.msra.mxu0 0
        %1141 = vmatpush.bf16.msra.mxu0 0
        %1142 = vmatpush.bf16.msra.mxu0 %v1133
        %1143 = vmatpush.bf16.msra.mxu0 %v1132
        %1144 = vmatmul.bf16.gmra.mxu0 %v1009
        %v1145 = vpop.f32.mrf.mxu0
        %v1146 = vadd.f32 %v278, %v1145
        %v1147 = vpop.f32.mrf.mxu0
        %1148 = vdwg.mxu0
        %v1153 = vunpack.c.l.b16 %v986
        %v1154 = vunpack.c.l.b16 %v987
        %v1155 = vunpack.c.l.b16 %v988
        %v1156 = vunpack.c.l.b16 %v989
        %v1157 = vpack.c.b16 %v1154, %v1153
        %v1158 = vpack.c.b16 %v1156, %v1155
        %1161 = vmatpush.bf16.msra.mxu0 0
        %1162 = vmatpush.bf16.msra.mxu0 0
        %1163 = vmatpush.bf16.msra.mxu0 0
        %1164 = vmatpush.bf16.msra.mxu0 0
        %1165 = vmatpush.bf16.msra.mxu0 0
        %1166 = vmatpush.bf16.msra.mxu0 0
        %1167 = vmatpush.bf16.msra.mxu0 %v1158
        %1168 = vmatpush.bf16.msra.mxu0 %v1157
        %1169 = vmatmul.bf16.gmra.mxu0 %v1009
        %v1170 = vpop.f32.mrf.mxu0
        %v1171 = vadd.f32 %v279, %v1170
        %v1172 = vpop.f32.mrf.mxu0
        %1173 = vdwg.mxu0
        %v1178 = vunpack.c.l.b16 %v990
        %v1179 = vunpack.c.l.b16 %v991
        %v1180 = vunpack.c.l.b16 %v992
        %v1181 = vunpack.c.l.b16 %v993
        %v1182 = vpack.c.b16 %v1179, %v1178
        %v1183 = vpack.c.b16 %v1181, %v1180
        %1186 = vmatpush.bf16.msra.mxu0 0
        %1187 = vmatpush.bf16.msra.mxu0 0
        %1188 = vmatpush.bf16.msra.mxu0 0
        %1189 = vmatpush.bf16.msra.mxu0 0
        %1190 = vmatpush.bf16.msra.mxu0 0
        %1191 = vmatpush.bf16.msra.mxu0 0
        %1192 = vmatpush.bf16.msra.mxu0 %v1183
        %1193 = vmatpush.bf16.msra.mxu0 %v1182
        %1194 = vmatmul.bf16.gmra.mxu0 %v1009
        %v1195 = vpop.f32.mrf.mxu0
        %v1196 = vadd.f32 %v280, %v1195
        %v1197 = vpop.f32.mrf.mxu0
        %1198 = vdwg.mxu0
        %v1199 = vld [vmem:[%s1 + $0x2] sm:$0x1]
        %v1200 = vld [vmem:[%s1 + $0x3] sm:$0x1]
        %1201 = vadd.xlane.f32.xlu0 %v1021
        %v1202 = vpop.xlane.xlu0 %1201
        %1203 = vadd.xlane.f32.xlu0 %v1046
        %v1204 = vpop.xlane.xlu0 %1203
        %1205 = vadd.xlane.f32.xlu0 %v1071
        %v1206 = vpop.xlane.xlu0 %1205
        %1207 = vadd.xlane.f32.xlu0 %v1096
        %v1208 = vpop.xlane.xlu0 %1207
        %1209 = vadd.xlane.f32.xlu0 %v1121
        %v1210 = vpop.xlane.xlu0 %1209
        %1211 = vadd.xlane.f32.xlu0 %v1146
        %v1212 = vpop.xlane.xlu0 %1211
        %1213 = vadd.xlane.f32.xlu0 %v1171
        %v1214 = vpop.xlane.xlu0 %1213
        %1215 = vadd.xlane.f32.xlu0 %v1196
        %v1216 = vpop.xlane.xlu0 %1215
        %v1217 = vmul.f32 %v1202, %v305
        %v1218 = vmul.f32 %v1204, %v305
        %v1219 = vmul.f32 %v1206, %v305
        %v1220 = vmul.f32 %v1208, %v305
        %v1221 = vmul.f32 %v1210, %v305
        %v1222 = vmul.f32 %v1212, %v305
        %v1223 = vmul.f32 %v1214, %v305
        %v1224 = vmul.f32 %v1216, %v305
        %v1225 = vsub.f32 %v1021, %v1217
        %v1226 = vsub.f32 %v1046, %v1218
        %v1227 = vsub.f32 %v1071, %v1219
        %v1228 = vsub.f32 %v1096, %v1220
        %v1229 = vsub.f32 %v1121, %v1221
        %v1230 = vsub.f32 %v1146, %v1222
        %v1231 = vsub.f32 %v1171, %v1223
        %v1232 = vsub.f32 %v1196, %v1224
        %v1233 = vmul.f32 %v1225, %v1225
        %v1234 = vmul.f32 %v1226, %v1226
        %v1235 = vmul.f32 %v1227, %v1227
        %v1236 = vmul.f32 %v1228, %v1228
        %v1237 = vmul.f32 %v1229, %v1229
        %v1238 = vmul.f32 %v1230, %v1230
        %v1239 = vmul.f32 %v1231, %v1231
        %v1240 = vmul.f32 %v1232, %v1232
        %1241 = vadd.xlane.f32.xlu0 %v1233
        %v1242 = vpop.xlane.xlu0 %1241
        %1243 = vadd.xlane.f32.xlu0 %v1234
        %v1244 = vpop.xlane.xlu0 %1243
        %1245 = vadd.xlane.f32.xlu0 %v1235
        %v1246 = vpop.xlane.xlu0 %1245
        %1247 = vadd.xlane.f32.xlu0 %v1236
        %v1248 = vpop.xlane.xlu0 %1247
        %1249 = vadd.xlane.f32.xlu0 %v1237
        %v1250 = vpop.xlane.xlu0 %1249
        %1251 = vadd.xlane.f32.xlu0 %v1238
        %v1252 = vpop.xlane.xlu0 %1251
        %1253 = vadd.xlane.f32.xlu0 %v1239
        %v1254 = vpop.xlane.xlu0 %1253
        %1255 = vadd.xlane.f32.xlu0 %v1240
        %v1256 = vpop.xlane.xlu0 %1255
        %v1257 = vmul.f32 %v1242, %v305
        %v1258 = vmul.f32 %v1244, %v305
        %v1259 = vmul.f32 %v1246, %v305
        %v1260 = vmul.f32 %v1248, %v305
        %v1261 = vmul.f32 %v1250, %v305
        %v1262 = vmul.f32 %v1252, %v305
        %v1263 = vmul.f32 %v1254, %v305
        %v1264 = vmul.f32 %v1256, %v305
        %v1265 = vadd.f32 %v1257, 1e-05
        %v1266 = vadd.f32 %v1258, 1e-05
        %v1267 = vadd.f32 %v1259, 1e-05
        %v1268 = vadd.f32 %v1260, 1e-05
        %v1269 = vadd.f32 %v1261, 1e-05
        %v1270 = vadd.f32 %v1262, 1e-05
        %v1271 = vadd.f32 %v1263, 1e-05
        %v1272 = vadd.f32 %v1264, 1e-05
        %v1273 = vrsqrt.pop %v1265
        %v1274 = vmul.f32 %v1273, %v1265
        %v1275 = vmul.f32 %v1274, %v1273
        %v1276 = vmul.f32 0.5, %v1275
        %v1277 = vsub.f32 1.5, %v1276
        %v1278 = vmul.f32 %v1273, %v1277
        %vm1279 = vweird.f32 %v1265
        %vm1280 = vweird.f32 %v1273
        %vm1281 = vmor %vm1279, %vm1280
        %v1282 = vsel %vm1281, %v1273, %v1278
        %v1283 = vrsqrt.pop %v1266
        %v1284 = vmul.f32 %v1283, %v1266
        %v1285 = vmul.f32 %v1284, %v1283
        %v1286 = vmul.f32 0.5, %v1285
        %v1287 = vsub.f32 1.5, %v1286
        %v1288 = vmul.f32 %v1283, %v1287
        %vm1289 = vweird.f32 %v1266
        %vm1290 = vweird.f32 %v1283
        %vm1291 = vmor %vm1289, %vm1290
        %v1292 = vsel %vm1291, %v1283, %v1288
        %v1293 = vrsqrt.pop %v1267
        %v1294 = vmul.f32 %v1293, %v1267
        %v1295 = vmul.f32 %v1294, %v1293
        %v1296 = vmul.f32 0.5, %v1295
        %v1297 = vsub.f32 1.5, %v1296
        %v1298 = vmul.f32 %v1293, %v1297
        %vm1299 = vweird.f32 %v1267
        %vm1300 = vweird.f32 %v1293
        %vm1301 = vmor %vm1299, %vm1300
        %v1302 = vsel %vm1301, %v1293, %v1298
        %v1303 = vrsqrt.pop %v1268
        %v1304 = vmul.f32 %v1303, %v1268
        %v1305 = vmul.f32 %v1304, %v1303
        %v1306 = vmul.f32 0.5, %v1305
        %v1307 = vsub.f32 1.5, %v1306
        %v1308 = vmul.f32 %v1303, %v1307
        %vm1309 = vweird.f32 %v1268
        %vm1310 = vweird.f32 %v1303
        %vm1311 = vmor %vm1309, %vm1310
        %v1312 = vsel %vm1311, %v1303, %v1308
        %v1313 = vrsqrt.pop %v1269
        %v1314 = vmul.f32 %v1313, %v1269
        %v1315 = vmul.f32 %v1314, %v1313
        %v1316 = vmul.f32 0.5, %v1315
        %v1317 = vsub.f32 1.5, %v1316
        %v1318 = vmul.f32 %v1313, %v1317
        %vm1319 = vweird.f32 %v1269
        %vm1320 = vweird.f32 %v1313
        %vm1321 = vmor %vm1319, %vm1320
        %v1322 = vsel %vm1321, %v1313, %v1318
        %v1323 = vrsqrt.pop %v1270
        %v1324 = vmul.f32 %v1323, %v1270
        %v1325 = vmul.f32 %v1324, %v1323
        %v1326 = vmul.f32 0.5, %v1325
        %v1327 = vsub.f32 1.5, %v1326
        %v1328 = vmul.f32 %v1323, %v1327
        %vm1329 = vweird.f32 %v1270
        %vm1330 = vweird.f32 %v1323
        %vm1331 = vmor %vm1329, %vm1330
        %v1332 = vsel %vm1331, %v1323, %v1328
        %v1333 = vrsqrt.pop %v1271
        %v1334 = vmul.f32 %v1333, %v1271
        %v1335 = vmul.f32 %v1334, %v1333
        %v1336 = vmul.f32 0.5, %v1335
        %v1337 = vsub.f32 1.5, %v1336
        %v1338 = vmul.f32 %v1333, %v1337
        %vm1339 = vweird.f32 %v1271
        %vm1340 = vweird.f32 %v1333
        %vm1341 = vmor %vm1339, %vm1340
        %v1342 = vsel %vm1341, %v1333, %v1338
        %v1343 = vrsqrt.pop %v1272
        %v1344 = vmul.f32 %v1343, %v1272
        %v1345 = vmul.f32 %v1344, %v1343
        %v1346 = vmul.f32 0.5, %v1345
        %v1347 = vsub.f32 1.5, %v1346
        %v1348 = vmul.f32 %v1343, %v1347
        %vm1349 = vweird.f32 %v1272
        %vm1350 = vweird.f32 %v1343
        %vm1351 = vmor %vm1349, %vm1350
        %v1352 = vsel %vm1351, %v1343, %v1348
        %v1353 = vmul.f32 %v1225, %v1282
        %v1354 = vmul.f32 %v1226, %v1292
        %v1355 = vmul.f32 %v1227, %v1302
        %v1356 = vmul.f32 %v1228, %v1312
        %v1357 = vmul.f32 %v1229, %v1322
        %v1358 = vmul.f32 %v1230, %v1332
        %v1359 = vmul.f32 %v1231, %v1342
        %v1360 = vmul.f32 %v1232, %v1352
        %v1361 = vperm.slane %v1199, 0
        %v1362 = vmul.f32 %v1353, %v1361
        %v1363 = vmul.f32 %v1354, %v1361
        %v1364 = vmul.f32 %v1355, %v1361
        %v1365 = vmul.f32 %v1356, %v1361
        %v1366 = vmul.f32 %v1357, %v1361
        %v1367 = vmul.f32 %v1358, %v1361
        %v1368 = vmul.f32 %v1359, %v1361
        %v1369 = vmul.f32 %v1360, %v1361
        %v1370 = vperm.slane %v1200, 0
        %v1371 = vadd.f32 %v1362, %v1370
        %v1372 = vadd.f32 %v1363, %v1370
        %v1373 = vadd.f32 %v1364, %v1370
        %v1374 = vadd.f32 %v1365, %v1370
        %v1375 = vadd.f32 %v1366, %v1370
        %v1376 = vadd.f32 %v1367, %v1370
        %v1377 = vadd.f32 %v1368, %v1370
        %v1378 = vadd.f32 %v1369, %v1370
        %v1379 = vpack.c.bf16 %v1372, %v1371
        %v1380 = vpack.c.bf16 %v1374, %v1373
        %v1381 = vpack.c.bf16 %v1376, %v1375
        %v1382 = vpack.c.bf16 %v1378, %v1377
        %v1383 = vld [vmem:[%s4] sm:$0xff]
        %v1384 = vld [vmem:[%s4 + $0x8] sm:$0xff]
        %v1385 = vld [vmem:[%s4 + $0x10] sm:$0xff]
        %v1386 = vld [vmem:[%s4 + $0x18] sm:$0xff]
        %v1387 = vld [vmem:[%s4 + $0x20] sm:$0xff]
        %v1388 = vld [vmem:[%s4 + $0x28] sm:$0xff]
        %v1389 = vld [vmem:[%s4 + $0x30] sm:$0xff]
        %v1390 = vld [vmem:[%s4 + $0x38] sm:$0xff]
        %v1391 = vld [vmem:[%s4 + $0x40] sm:$0xff]
        %v1392 = vld [vmem:[%s4 + $0x48] sm:$0xff]
        %v1393 = vld [vmem:[%s4 + $0x50] sm:$0xff]
        %v1394 = vld [vmem:[%s4 + $0x58] sm:$0xff]
        %v1395 = vld [vmem:[%s4 + $0x60] sm:$0xff]
        %v1396 = vld [vmem:[%s4 + $0x68] sm:$0xff]
        %v1397 = vld [vmem:[%s4 + $0x70] sm:$0xff]
        %v1398 = vld [vmem:[%s4 + $0x78] sm:$0xff]
        %v1399 = vld [vmem:[%s4 + $0x80] sm:$0xff]
        %v1400 = vld [vmem:[%s4 + $0x88] sm:$0xff]
        %v1401 = vld [vmem:[%s4 + $0x90] sm:$0xff]
        %v1402 = vld [vmem:[%s4 + $0x98] sm:$0xff]
        %v1403 = vld [vmem:[%s4 + $0xa0] sm:$0xff]
        %v1404 = vld [vmem:[%s4 + $0xa8] sm:$0xff]
        %v1405 = vld [vmem:[%s4 + $0xb0] sm:$0xff]
        %v1406 = vld [vmem:[%s4 + $0xb8] sm:$0xff]
        %v1407 = vld [vmem:[%s4 + $0xc0] sm:$0xff]
        %v1408 = vld [vmem:[%s4 + $0xc8] sm:$0xff]
        %v1409 = vld [vmem:[%s4 + $0xd0] sm:$0xff]
        %v1410 = vld [vmem:[%s4 + $0xd8] sm:$0xff]
        %v1411 = vld [vmem:[%s4 + $0xe0] sm:$0xff]
        %v1412 = vld [vmem:[%s4 + $0xe8] sm:$0xff]
        %v1413 = vld [vmem:[%s4 + $0xf0] sm:$0xff]
        %v1414 = vld [vmem:[%s4 + $0xf8] sm:$0xff]
        %v1447 = vunpack.c.l.b16 %v1383
        %v1448 = vunpack.c.h.b16 %v1383
        %v1449 = vunpack.c.l.b16 %v1384
        %v1450 = vunpack.c.h.b16 %v1384
        %v1451 = vunpack.c.l.b16 %v1385
        %v1452 = vunpack.c.h.b16 %v1385
        %v1453 = vunpack.c.l.b16 %v1386
        %v1454 = vunpack.c.h.b16 %v1386
        %v1455 = vunpack.c.l.b16 %v1387
        %v1456 = vunpack.c.h.b16 %v1387
        %v1457 = vunpack.c.l.b16 %v1388
        %v1458 = vunpack.c.h.b16 %v1388
        %v1459 = vunpack.c.l.b16 %v1389
        %v1460 = vunpack.c.h.b16 %v1389
        %v1461 = vunpack.c.l.b16 %v1390
        %v1462 = vunpack.c.h.b16 %v1390
        %v1463 = vunpack.c.l.b16 %v1391
        %v1464 = vunpack.c.h.b16 %v1391
        %v1465 = vunpack.c.l.b16 %v1392
        %v1466 = vunpack.c.h.b16 %v1392
        %v1467 = vunpack.c.l.b16 %v1393
        %v1468 = vunpack.c.h.b16 %v1393
        %v1469 = vunpack.c.l.b16 %v1394
        %v1470 = vunpack.c.h.b16 %v1394
        %v1471 = vunpack.c.l.b16 %v1395
        %v1472 = vunpack.c.h.b16 %v1395
        %v1473 = vunpack.c.l.b16 %v1396
        %v1474 = vunpack.c.h.b16 %v1396
        %v1475 = vunpack.c.l.b16 %v1397
        %v1476 = vunpack.c.h.b16 %v1397
        %v1477 = vunpack.c.l.b16 %v1398
        %v1478 = vunpack.c.h.b16 %v1398
        %v1479 = vunpack.c.l.b16 %v1399
        %v1480 = vunpack.c.h.b16 %v1399
        %v1481 = vunpack.c.l.b16 %v1400
        %v1482 = vunpack.c.h.b16 %v1400
        %v1483 = vunpack.c.l.b16 %v1401
        %v1484 = vunpack.c.h.b16 %v1401
        %v1485 = vunpack.c.l.b16 %v1402
        %v1486 = vunpack.c.h.b16 %v1402
        %v1487 = vunpack.c.l.b16 %v1403
        %v1488 = vunpack.c.h.b16 %v1403
        %v1489 = vunpack.c.l.b16 %v1404
        %v1490 = vunpack.c.h.b16 %v1404
        %v1491 = vunpack.c.l.b16 %v1405
        %v1492 = vunpack.c.h.b16 %v1405
        %v1493 = vunpack.c.l.b16 %v1406
        %v1494 = vunpack.c.h.b16 %v1406
        %v1495 = vunpack.c.l.b16 %v1407
        %v1496 = vunpack.c.h.b16 %v1407
        %v1497 = vunpack.c.l.b16 %v1408
        %v1498 = vunpack.c.h.b16 %v1408
        %v1499 = vunpack.c.l.b16 %v1409
        %v1500 = vunpack.c.h.b16 %v1409
        %v1501 = vunpack.c.l.b16 %v1410
        %v1502 = vunpack.c.h.b16 %v1410
        %v1503 = vunpack.c.l.b16 %v1411
        %v1504 = vunpack.c.h.b16 %v1411
        %v1505 = vunpack.c.l.b16 %v1412
        %v1506 = vunpack.c.h.b16 %v1412
        %v1507 = vunpack.c.l.b16 %v1413
        %v1508 = vunpack.c.h.b16 %v1413
        %v1509 = vunpack.c.l.b16 %v1414
        %v1510 = vunpack.c.h.b16 %v1414
        %v1511 = vpack.c.b16 %v1451, %v1447
        %v1512 = vpack.c.b16 %v1452, %v1448
        %v1513 = vpack.c.b16 %v1453, %v1449
        %v1514 = vpack.c.b16 %v1454, %v1450
        %v1515 = vpack.c.b16 %v1459, %v1455
        %v1516 = vpack.c.b16 %v1460, %v1456
        %v1517 = vpack.c.b16 %v1461, %v1457
        %v1518 = vpack.c.b16 %v1462, %v1458
        %v1519 = vpack.c.b16 %v1467, %v1463
        %v1520 = vpack.c.b16 %v1468, %v1464
        %v1521 = vpack.c.b16 %v1469, %v1465
        %v1522 = vpack.c.b16 %v1470, %v1466
        %v1523 = vpack.c.b16 %v1475, %v1471
        %v1524 = vpack.c.b16 %v1476, %v1472
        %v1525 = vpack.c.b16 %v1477, %v1473
        %v1526 = vpack.c.b16 %v1478, %v1474
        %v1527 = vpack.c.b16 %v1483, %v1479
        %v1528 = vpack.c.b16 %v1484, %v1480
        %v1529 = vpack.c.b16 %v1485, %v1481
        %v1530 = vpack.c.b16 %v1486, %v1482
        %v1531 = vpack.c.b16 %v1491, %v1487
        %v1532 = vpack.c.b16 %v1492, %v1488
        %v1533 = vpack.c.b16 %v1493, %v1489
        %v1534 = vpack.c.b16 %v1494, %v1490
        %v1535 = vpack.c.b16 %v1499, %v1495
        %v1536 = vpack.c.b16 %v1500, %v1496
        %v1537 = vpack.c.b16 %v1501, %v1497
        %v1538 = vpack.c.b16 %v1502, %v1498
        %v1539 = vpack.c.b16 %v1507, %v1503
        %v1540 = vpack.c.b16 %v1508, %v1504
        %v1541 = vpack.c.b16 %v1509, %v1505
        %v1542 = vpack.c.b16 %v1510, %v1506
        %1575 = vmatpush.bf16.msra.mxu0 %v1539
        %1576 = vmatpush.bf16.msra.mxu0 %v1535
        %1577 = vmatpush.bf16.msra.mxu0 %v1531
        %1578 = vmatpush.bf16.msra.mxu0 %v1527
        %1579 = vmatpush.bf16.msra.mxu0 %v1523
        %1580 = vmatpush.bf16.msra.mxu0 %v1519
        %1581 = vmatpush.bf16.msra.mxu0 %v1515
        %1582 = vmatpush.bf16.msra.mxu0 %v1511
        %1583 = vmatmul.bf16.gmra.mxu0 %v1379
        %v1584 = vpop.f32.mrf.mxu0
        %v1585 = vadd.f32 0.0, %v1584
        %v1586 = vpop.f32.mrf.mxu0
        %v1587 = vadd.f32 0.0, %v1586
        %1588 = vmatmul.bf16.gmra.mxu0 %v1380
        %v1589 = vpop.f32.mrf.mxu0
        %v1590 = vadd.f32 0.0, %v1589
        %v1591 = vpop.f32.mrf.mxu0
        %v1592 = vadd.f32 0.0, %v1591
        %1593 = vmatmul.bf16.gmra.mxu0 %v1381
        %v1594 = vpop.f32.mrf.mxu0
        %v1595 = vadd.f32 0.0, %v1594
        %v1596 = vpop.f32.mrf.mxu0
        %v1597 = vadd.f32 0.0, %v1596
        %1598 = vmatmul.bf16.gmra.mxu0 %v1382
        %v1599 = vpop.f32.mrf.mxu0
        %v1600 = vadd.f32 0.0, %v1599
        %v1601 = vpop.f32.mrf.mxu0
        %v1602 = vadd.f32 0.0, %v1601
        %1603 = vdwg.mxu0
        %1604 = vmatpush.bf16.msra.mxu0 %v1540
        %1605 = vmatpush.bf16.msra.mxu0 %v1536
        %1606 = vmatpush.bf16.msra.mxu0 %v1532
        %1607 = vmatpush.bf16.msra.mxu0 %v1528
        %1608 = vmatpush.bf16.msra.mxu0 %v1524
        %1609 = vmatpush.bf16.msra.mxu0 %v1520
        %1610 = vmatpush.bf16.msra.mxu0 %v1516
        %1611 = vmatpush.bf16.msra.mxu0 %v1512
        %1612 = vmatmul.bf16.gmra.mxu0 %v1379
        %v1613 = vpop.f32.mrf.mxu0
        %v1614 = vadd.f32 0.0, %v1613
        %v1615 = vpop.f32.mrf.mxu0
        %v1616 = vadd.f32 0.0, %v1615
        %1617 = vmatmul.bf16.gmra.mxu0 %v1380
        %v1618 = vpop.f32.mrf.mxu0
        %v1619 = vadd.f32 0.0, %v1618
        %v1620 = vpop.f32.mrf.mxu0
        %v1621 = vadd.f32 0.0, %v1620
        %1622 = vmatmul.bf16.gmra.mxu0 %v1381
        %v1623 = vpop.f32.mrf.mxu0
        %v1624 = vadd.f32 0.0, %v1623
        %v1625 = vpop.f32.mrf.mxu0
        %v1626 = vadd.f32 0.0, %v1625
        %1627 = vmatmul.bf16.gmra.mxu0 %v1382
        %v1628 = vpop.f32.mrf.mxu0
        %v1629 = vadd.f32 0.0, %v1628
        %v1630 = vpop.f32.mrf.mxu0
        %v1631 = vadd.f32 0.0, %v1630
        %1632 = vdwg.mxu0
        %1633 = vmatpush.bf16.msra.mxu0 %v1541
        %1634 = vmatpush.bf16.msra.mxu0 %v1537
        %1635 = vmatpush.bf16.msra.mxu0 %v1533
        %1636 = vmatpush.bf16.msra.mxu0 %v1529
        %1637 = vmatpush.bf16.msra.mxu0 %v1525
        %1638 = vmatpush.bf16.msra.mxu0 %v1521
        %1639 = vmatpush.bf16.msra.mxu0 %v1517
        %1640 = vmatpush.bf16.msra.mxu0 %v1513
        %1641 = vmatmul.bf16.gmra.mxu0 %v1379
        %v1642 = vpop.f32.mrf.mxu0
        %v1643 = vadd.f32 0.0, %v1642
        %v1644 = vpop.f32.mrf.mxu0
        %v1645 = vadd.f32 0.0, %v1644
        %1646 = vmatmul.bf16.gmra.mxu0 %v1380
        %v1647 = vpop.f32.mrf.mxu0
        %v1648 = vadd.f32 0.0, %v1647
        %v1649 = vpop.f32.mrf.mxu0
        %v1650 = vadd.f32 0.0, %v1649
        %1651 = vmatmul.bf16.gmra.mxu0 %v1381
        %v1652 = vpop.f32.mrf.mxu0
        %v1653 = vadd.f32 0.0, %v1652
        %v1654 = vpop.f32.mrf.mxu0
        %v1655 = vadd.f32 0.0, %v1654
        %1656 = vmatmul.bf16.gmra.mxu0 %v1382
        %v1657 = vpop.f32.mrf.mxu0
        %v1658 = vadd.f32 0.0, %v1657
        %v1659 = vpop.f32.mrf.mxu0
        %v1660 = vadd.f32 0.0, %v1659
        %1661 = vdwg.mxu0
        %1662 = vmatpush.bf16.msra.mxu0 %v1542
        %1663 = vmatpush.bf16.msra.mxu0 %v1538
        %1664 = vmatpush.bf16.msra.mxu0 %v1534
        %1665 = vmatpush.bf16.msra.mxu0 %v1530
        %1666 = vmatpush.bf16.msra.mxu0 %v1526
        %1667 = vmatpush.bf16.msra.mxu0 %v1522
        %1668 = vmatpush.bf16.msra.mxu0 %v1518
        %1669 = vmatpush.bf16.msra.mxu0 %v1514
        %1670 = vmatmul.bf16.gmra.mxu0 %v1379
        %v1671 = vpop.f32.mrf.mxu0
        %v1672 = vadd.f32 0.0, %v1671
        %v1673 = vpop.f32.mrf.mxu0
        %v1674 = vadd.f32 0.0, %v1673
        %1675 = vmatmul.bf16.gmra.mxu0 %v1380
        %v1676 = vpop.f32.mrf.mxu0
        %v1677 = vadd.f32 0.0, %v1676
        %v1678 = vpop.f32.mrf.mxu0
        %v1679 = vadd.f32 0.0, %v1678
        %1680 = vmatmul.bf16.gmra.mxu0 %v1381
        %v1681 = vpop.f32.mrf.mxu0
        %v1682 = vadd.f32 0.0, %v1681
        %v1683 = vpop.f32.mrf.mxu0
        %v1684 = vadd.f32 0.0, %v1683
        %1685 = vmatmul.bf16.gmra.mxu0 %v1382
        %v1686 = vpop.f32.mrf.mxu0
        %v1687 = vadd.f32 0.0, %v1686
        %v1688 = vpop.f32.mrf.mxu0
        %v1689 = vadd.f32 0.0, %v1688
        %1690 = vdwg.mxu0
        %v1691 = vmul.f32 %v1585, 0.5
        %v1692 = vmul.f32 %v1614, 0.5
        %v1693 = vmul.f32 %v1643, 0.5
        %v1694 = vmul.f32 %v1672, 0.5
        %v1695 = vmul.f32 %v1587, 0.5
        %v1696 = vmul.f32 %v1616, 0.5
        %v1697 = vmul.f32 %v1645, 0.5
        %v1698 = vmul.f32 %v1674, 0.5
        %v1699 = vmul.f32 %v1590, 0.5
        %v1700 = vmul.f32 %v1619, 0.5
        %v1701 = vmul.f32 %v1648, 0.5
        %v1702 = vmul.f32 %v1677, 0.5
        %v1703 = vmul.f32 %v1592, 0.5
        %v1704 = vmul.f32 %v1621, 0.5
        %v1705 = vmul.f32 %v1650, 0.5
        %v1706 = vmul.f32 %v1679, 0.5
        %v1707 = vmul.f32 %v1595, 0.5
        %v1708 = vmul.f32 %v1624, 0.5
        %v1709 = vmul.f32 %v1653, 0.5
        %v1710 = vmul.f32 %v1682, 0.5
        %v1711 = vmul.f32 %v1597, 0.5
        %v1712 = vmul.f32 %v1626, 0.5
        %v1713 = vmul.f32 %v1655, 0.5
        %v1714 = vmul.f32 %v1684, 0.5
        %v1715 = vmul.f32 %v1600, 0.5
        %v1716 = vmul.f32 %v1629, 0.5
        %v1717 = vmul.f32 %v1658, 0.5
        %v1718 = vmul.f32 %v1687, 0.5
        %v1719 = vmul.f32 %v1602, 0.5
        %v1720 = vmul.f32 %v1631, 0.5
        %v1721 = vmul.f32 %v1660, 0.5
        %v1722 = vmul.f32 %v1689, 0.5
        %v1723 = vmul.f32 %v1585, 0.044715
        %v1724 = vmul.f32 %v1614, 0.044715
        %v1725 = vmul.f32 %v1643, 0.044715
        %v1726 = vmul.f32 %v1672, 0.044715
        %v1727 = vmul.f32 %v1587, 0.044715
        %v1728 = vmul.f32 %v1616, 0.044715
        %v1729 = vmul.f32 %v1645, 0.044715
        %v1730 = vmul.f32 %v1674, 0.044715
        %v1731 = vmul.f32 %v1590, 0.044715
        %v1732 = vmul.f32 %v1619, 0.044715
        %v1733 = vmul.f32 %v1648, 0.044715
        %v1734 = vmul.f32 %v1677, 0.044715
        %v1735 = vmul.f32 %v1592, 0.044715
        %v1736 = vmul.f32 %v1621, 0.044715
        %v1737 = vmul.f32 %v1650, 0.044715
        %v1738 = vmul.f32 %v1679, 0.044715
        %v1739 = vmul.f32 %v1595, 0.044715
        %v1740 = vmul.f32 %v1624, 0.044715
        %v1741 = vmul.f32 %v1653, 0.044715
        %v1742 = vmul.f32 %v1682, 0.044715
        %v1743 = vmul.f32 %v1597, 0.044715
        %v1744 = vmul.f32 %v1626, 0.044715
        %v1745 = vmul.f32 %v1655, 0.044715
        %v1746 = vmul.f32 %v1684, 0.044715
        %v1747 = vmul.f32 %v1600, 0.044715
        %v1748 = vmul.f32 %v1629, 0.044715
        %v1749 = vmul.f32 %v1658, 0.044715
        %v1750 = vmul.f32 %v1687, 0.044715
        %v1751 = vmul.f32 %v1602, 0.044715
        %v1752 = vmul.f32 %v1631, 0.044715
        %v1753 = vmul.f32 %v1660, 0.044715
        %v1754 = vmul.f32 %v1689, 0.044715
        %v1755 = vmul.f32 %v1723, %v1585
        %v1756 = vmul.f32 %v1724, %v1614
        %v1757 = vmul.f32 %v1725, %v1643
        %v1758 = vmul.f32 %v1726, %v1672
        %v1759 = vmul.f32 %v1727, %v1587
        %v1760 = vmul.f32 %v1728, %v1616
        %v1761 = vmul.f32 %v1729, %v1645
        %v1762 = vmul.f32 %v1730, %v1674
        %v1763 = vmul.f32 %v1731, %v1590
        %v1764 = vmul.f32 %v1732, %v1619
        %v1765 = vmul.f32 %v1733, %v1648
        %v1766 = vmul.f32 %v1734, %v1677
        %v1767 = vmul.f32 %v1735, %v1592
        %v1768 = vmul.f32 %v1736, %v1621
        %v1769 = vmul.f32 %v1737, %v1650
        %v1770 = vmul.f32 %v1738, %v1679
        %v1771 = vmul.f32 %v1739, %v1595
        %v1772 = vmul.f32 %v1740, %v1624
        %v1773 = vmul.f32 %v1741, %v1653
        %v1774 = vmul.f32 %v1742, %v1682
        %v1775 = vmul.f32 %v1743, %v1597
        %v1776 = vmul.f32 %v1744, %v1626
        %v1777 = vmul.f32 %v1745, %v1655
        %v1778 = vmul.f32 %v1746, %v1684
        %v1779 = vmul.f32 %v1747, %v1600
        %v1780 = vmul.f32 %v1748, %v1629
        %v1781 = vmul.f32 %v1749, %v1658
        %v1782 = vmul.f32 %v1750, %v1687
        %v1783 = vmul.f32 %v1751, %v1602
        %v1784 = vmul.f32 %v1752, %v1631
        %v1785 = vmul.f32 %v1753, %v1660
        %v1786 = vmul.f32 %v1754, %v1689
        %v1787 = vmul.f32 %v1755, %v1585
        %v1788 = vmul.f32 %v1756, %v1614
        %v1789 = vmul.f32 %v1757, %v1643
        %v1790 = vmul.f32 %v1758, %v1672
        %v1791 = vmul.f32 %v1759, %v1587
        %v1792 = vmul.f32 %v1760, %v1616
        %v1793 = vmul.f32 %v1761, %v1645
        %v1794 = vmul.f32 %v1762, %v1674
        %v1795 = vmul.f32 %v1763, %v1590
        %v1796 = vmul.f32 %v1764, %v1619
        %v1797 = vmul.f32 %v1765, %v1648
        %v1798 = vmul.f32 %v1766, %v1677
        %v1799 = vmul.f32 %v1767, %v1592
        %v1800 = vmul.f32 %v1768, %v1621
        %v1801 = vmul.f32 %v1769, %v1650
        %v1802 = vmul.f32 %v1770, %v1679
        %v1803 = vmul.f32 %v1771, %v1595
        %v1804 = vmul.f32 %v1772, %v1624
        %v1805 = vmul.f32 %v1773, %v1653
        %v1806 = vmul.f32 %v1774, %v1682
        %v1807 = vmul.f32 %v1775, %v1597
        %v1808 = vmul.f32 %v1776, %v1626
        %v1809 = vmul.f32 %v1777, %v1655
        %v1810 = vmul.f32 %v1778, %v1684
        %v1811 = vmul.f32 %v1779, %v1600
        %v1812 = vmul.f32 %v1780, %v1629
        %v1813 = vmul.f32 %v1781, %v1658
        %v1814 = vmul.f32 %v1782, %v1687
        %v1815 = vmul.f32 %v1783, %v1602
        %v1816 = vmul.f32 %v1784, %v1631
        %v1817 = vmul.f32 %v1785, %v1660
        %v1818 = vmul.f32 %v1786, %v1689
        %v1819 = vadd.f32 %v1585, %v1787
        %v1820 = vadd.f32 %v1614, %v1788
        %v1821 = vadd.f32 %v1643, %v1789
        %v1822 = vadd.f32 %v1672, %v1790
        %v1823 = vadd.f32 %v1587, %v1791
        %v1824 = vadd.f32 %v1616, %v1792
        %v1825 = vadd.f32 %v1645, %v1793
        %v1826 = vadd.f32 %v1674, %v1794
        %v1827 = vadd.f32 %v1590, %v1795
        %v1828 = vadd.f32 %v1619, %v1796
        %v1829 = vadd.f32 %v1648, %v1797
        %v1830 = vadd.f32 %v1677, %v1798
        %v1831 = vadd.f32 %v1592, %v1799
        %v1832 = vadd.f32 %v1621, %v1800
        %v1833 = vadd.f32 %v1650, %v1801
        %v1834 = vadd.f32 %v1679, %v1802
        %v1835 = vadd.f32 %v1595, %v1803
        %v1836 = vadd.f32 %v1624, %v1804
        %v1837 = vadd.f32 %v1653, %v1805
        %v1838 = vadd.f32 %v1682, %v1806
        %v1839 = vadd.f32 %v1597, %v1807
        %v1840 = vadd.f32 %v1626, %v1808
        %v1841 = vadd.f32 %v1655, %v1809
        %v1842 = vadd.f32 %v1684, %v1810
        %v1843 = vadd.f32 %v1600, %v1811
        %v1844 = vadd.f32 %v1629, %v1812
        %v1845 = vadd.f32 %v1658, %v1813
        %v1846 = vadd.f32 %v1687, %v1814
        %v1847 = vadd.f32 %v1602, %v1815
        %v1848 = vadd.f32 %v1631, %v1816
        %v1849 = vadd.f32 %v1660, %v1817
        %v1850 = vadd.f32 %v1689, %v1818
        %v1851 = vmul.f32 %v1819, 0.7978846
        %v1852 = vmul.f32 %v1820, 0.7978846
        %v1853 = vmul.f32 %v1821, 0.7978846
        %v1854 = vmul.f32 %v1822, 0.7978846
        %v1855 = vmul.f32 %v1823, 0.7978846
        %v1856 = vmul.f32 %v1824, 0.7978846
        %v1857 = vmul.f32 %v1825, 0.7978846
        %v1858 = vmul.f32 %v1826, 0.7978846
        %v1859 = vmul.f32 %v1827, 0.7978846
        %v1860 = vmul.f32 %v1828, 0.7978846
        %v1861 = vmul.f32 %v1829, 0.7978846
        %v1862 = vmul.f32 %v1830, 0.7978846
        %v1863 = vmul.f32 %v1831, 0.7978846
        %v1864 = vmul.f32 %v1832, 0.7978846
        %v1865 = vmul.f32 %v1833, 0.7978846
        %v1866 = vmul.f32 %v1834, 0.7978846
        %v1867 = vmul.f32 %v1835, 0.7978846
        %v1868 = vmul.f32 %v1836, 0.7978846
        %v1869 = vmul.f32 %v1837, 0.7978846
        %v1870 = vmul.f32 %v1838, 0.7978846
        %v1871 = vmul.f32 %v1839, 0.7978846
        %v1872 = vmul.f32 %v1840, 0.7978846
        %v1873 = vmul.f32 %v1841, 0.7978846
        %v1874 = vmul.f32 %v1842, 0.7978846
        %v1875 = vmul.f32 %v1843, 0.7978846
        %v1876 = vmul.f32 %v1844, 0.7978846
        %v1877 = vmul.f32 %v1845, 0.7978846
        %v1878 = vmul.f32 %v1846, 0.7978846
        %v1879 = vmul.f32 %v1847, 0.7978846
        %v1880 = vmul.f32 %v1848, 0.7978846
        %v1881 = vmul.f32 %v1849, 0.7978846
        %v1882 = vmul.f32 %v1850, 0.7978846
        %v1883 = vtanh.pop %v1851
        %v1884 = vtanh.pop %v1852
        %v1885 = vtanh.pop %v1853
        %v1886 = vtanh.pop %v1854
        %v1887 = vtanh.pop %v1855
        %v1888 = vtanh.pop %v1856
        %v1889 = vtanh.pop %v1857
        %v1890 = vtanh.pop %v1858
        %v1891 = vtanh.pop %v1859
        %v1892 = vtanh.pop %v1860
        %v1893 = vtanh.pop %v1861
        %v1894 = vtanh.pop %v1862
        %v1895 = vtanh.pop %v1863
        %v1896 = vtanh.pop %v1864
        %v1897 = vtanh.pop %v1865
        %v1898 = vtanh.pop %v1866
        %v1899 = vtanh.pop %v1867
        %v1900 = vtanh.pop %v1868
        %v1901 = vtanh.pop %v1869
        %v1902 = vtanh.pop %v1870
        %v1903 = vtanh.pop %v1871
        %v1904 = vtanh.pop %v1872
        %v1905 = vtanh.pop %v1873
        %v1906 = vtanh.pop %v1874
        %v1907 = vtanh.pop %v1875
        %v1908 = vtanh.pop %v1876
        %v1909 = vtanh.pop %v1877
        %v1910 = vtanh.pop %v1878
        %v1911 = vtanh.pop %v1879
        %v1912 = vtanh.pop %v1880
        %v1913 = vtanh.pop %v1881
        %v1914 = vtanh.pop %v1882
        %v1915 = vadd.f32 %v1883, 1.0
        %v1916 = vadd.f32 %v1884, 1.0
        %v1917 = vadd.f32 %v1885, 1.0
        %v1918 = vadd.f32 %v1886, 1.0
        %v1919 = vadd.f32 %v1887, 1.0
        %v1920 = vadd.f32 %v1888, 1.0
        %v1921 = vadd.f32 %v1889, 1.0
        %v1922 = vadd.f32 %v1890, 1.0
        %v1923 = vadd.f32 %v1891, 1.0
        %v1924 = vadd.f32 %v1892, 1.0
        %v1925 = vadd.f32 %v1893, 1.0
        %v1926 = vadd.f32 %v1894, 1.0
        %v1927 = vadd.f32 %v1895, 1.0
        %v1928 = vadd.f32 %v1896, 1.0
        %v1929 = vadd.f32 %v1897, 1.0
        %v1930 = vadd.f32 %v1898, 1.0
        %v1931 = vadd.f32 %v1899, 1.0
        %v1932 = vadd.f32 %v1900, 1.0
        %v1933 = vadd.f32 %v1901, 1.0
        %v1934 = vadd.f32 %v1902, 1.0
        %v1935 = vadd.f32 %v1903, 1.0
        %v1936 = vadd.f32 %v1904, 1.0
        %v1937 = vadd.f32 %v1905, 1.0
        %v1938 = vadd.f32 %v1906, 1.0
        %v1939 = vadd.f32 %v1907, 1.0
        %v1940 = vadd.f32 %v1908, 1.0
        %v1941 = vadd.f32 %v1909, 1.0
        %v1942 = vadd.f32 %v1910, 1.0
        %v1943 = vadd.f32 %v1911, 1.0
        %v1944 = vadd.f32 %v1912, 1.0
        %v1945 = vadd.f32 %v1913, 1.0
        %v1946 = vadd.f32 %v1914, 1.0
        %v1947 = vmul.f32 %v1691, %v1915
        %v1948 = vmul.f32 %v1692, %v1916
        %v1949 = vmul.f32 %v1693, %v1917
        %v1950 = vmul.f32 %v1694, %v1918
        %v1951 = vmul.f32 %v1695, %v1919
        %v1952 = vmul.f32 %v1696, %v1920
        %v1953 = vmul.f32 %v1697, %v1921
        %v1954 = vmul.f32 %v1698, %v1922
        %v1955 = vmul.f32 %v1699, %v1923
        %v1956 = vmul.f32 %v1700, %v1924
        %v1957 = vmul.f32 %v1701, %v1925
        %v1958 = vmul.f32 %v1702, %v1926
        %v1959 = vmul.f32 %v1703, %v1927
        %v1960 = vmul.f32 %v1704, %v1928
        %v1961 = vmul.f32 %v1705, %v1929
        %v1962 = vmul.f32 %v1706, %v1930
        %v1963 = vmul.f32 %v1707, %v1931
        %v1964 = vmul.f32 %v1708, %v1932
        %v1965 = vmul.f32 %v1709, %v1933
        %v1966 = vmul.f32 %v1710, %v1934
        %v1967 = vmul.f32 %v1711, %v1935
        %v1968 = vmul.f32 %v1712, %v1936
        %v1969 = vmul.f32 %v1713, %v1937
        %v1970 = vmul.f32 %v1714, %v1938
        %v1971 = vmul.f32 %v1715, %v1939
        %v1972 = vmul.f32 %v1716, %v1940
        %v1973 = vmul.f32 %v1717, %v1941
        %v1974 = vmul.f32 %v1718, %v1942
        %v1975 = vmul.f32 %v1719, %v1943
        %v1976 = vmul.f32 %v1720, %v1944
        %v1977 = vmul.f32 %v1721, %v1945
        %v1978 = vmul.f32 %v1722, %v1946
        %v1979 = vpack.c.bf16 %v1951, %v1947
        %v1980 = vpack.c.bf16 %v1952, %v1948
        %v1981 = vpack.c.bf16 %v1953, %v1949
        %v1982 = vpack.c.bf16 %v1954, %v1950
        %v1983 = vpack.c.bf16 %v1959, %v1955
        %v1984 = vpack.c.bf16 %v1960, %v1956
        %v1985 = vpack.c.bf16 %v1961, %v1957
        %v1986 = vpack.c.bf16 %v1962, %v1958
        %v1987 = vpack.c.bf16 %v1967, %v1963
        %v1988 = vpack.c.bf16 %v1968, %v1964
        %v1989 = vpack.c.bf16 %v1969, %v1965
        %v1990 = vpack.c.bf16 %v1970, %v1966
        %v1991 = vpack.c.bf16 %v1975, %v1971
        %v1992 = vpack.c.bf16 %v1976, %v1972
        %v1993 = vpack.c.bf16 %v1977, %v1973
        %v1994 = vpack.c.bf16 %v1978, %v1974
        %v1995 = vld [vmem:[#allocation2] sm:$0xf]
        %v1996 = vld [vmem:[#allocation2 + $0x4] sm:$0xf]
        %v1997 = vld [vmem:[#allocation2 + $0x8] sm:$0xf]
        %v1998 = vld [vmem:[#allocation2 + $0xc] sm:$0xf]
        %v1999 = vld [vmem:[#allocation2 + $0x10] sm:$0xf]
        %v2000 = vld [vmem:[#allocation2 + $0x14] sm:$0xf]
        %v2001 = vld [vmem:[#allocation2 + $0x18] sm:$0xf]
        %v2002 = vld [vmem:[#allocation2 + $0x1c] sm:$0xf]
        %v2003 = vld [vmem:[#allocation2 + $0x20] sm:$0xf]
        %v2004 = vld [vmem:[#allocation2 + $0x24] sm:$0xf]
        %v2005 = vld [vmem:[#allocation2 + $0x28] sm:$0xf]
        %v2006 = vld [vmem:[#allocation2 + $0x2c] sm:$0xf]
        %v2007 = vld [vmem:[#allocation2 + $0x30] sm:$0xf]
        %v2008 = vld [vmem:[#allocation2 + $0x34] sm:$0xf]
        %v2009 = vld [vmem:[#allocation2 + $0x38] sm:$0xf]
        %v2010 = vld [vmem:[#allocation2 + $0x3c] sm:$0xf]
        %v2011 = vld [vmem:[#allocation2 + $0x40] sm:$0xf]
        %v2012 = vld [vmem:[#allocation2 + $0x44] sm:$0xf]
        %v2013 = vld [vmem:[#allocation2 + $0x48] sm:$0xf]
        %v2014 = vld [vmem:[#allocation2 + $0x4c] sm:$0xf]
        %v2015 = vld [vmem:[#allocation2 + $0x50] sm:$0xf]
        %v2016 = vld [vmem:[#allocation2 + $0x54] sm:$0xf]
        %v2017 = vld [vmem:[#allocation2 + $0x58] sm:$0xf]
        %v2018 = vld [vmem:[#allocation2 + $0x5c] sm:$0xf]
        %v2019 = vld [vmem:[#allocation2 + $0x60] sm:$0xf]
        %v2020 = vld [vmem:[#allocation2 + $0x64] sm:$0xf]
        %v2021 = vld [vmem:[#allocation2 + $0x68] sm:$0xf]
        %v2022 = vld [vmem:[#allocation2 + $0x6c] sm:$0xf]
        %v2023 = vld [vmem:[#allocation2 + $0x70] sm:$0xf]
        %v2024 = vld [vmem:[#allocation2 + $0x74] sm:$0xf]
        %v2025 = vld [vmem:[#allocation2 + $0x78] sm:$0xf]
        %v2026 = vld [vmem:[#allocation2 + $0x7c] sm:$0xf]
        %v2027 = vld [vmem:[#allocation2 + $0x80] sm:$0xf]
        %v2028 = vld [vmem:[#allocation2 + $0x84] sm:$0xf]
        %v2029 = vld [vmem:[#allocation2 + $0x88] sm:$0xf]
        %v2030 = vld [vmem:[#allocation2 + $0x8c] sm:$0xf]
        %v2031 = vld [vmem:[#allocation2 + $0x90] sm:$0xf]
        %v2032 = vld [vmem:[#allocation2 + $0x94] sm:$0xf]
        %v2033 = vld [vmem:[#allocation2 + $0x98] sm:$0xf]
        %v2034 = vld [vmem:[#allocation2 + $0x9c] sm:$0xf]
        %v2035 = vld [vmem:[#allocation2 + $0xa0] sm:$0xf]
        %v2036 = vld [vmem:[#allocation2 + $0xa4] sm:$0xf]
        %v2037 = vld [vmem:[#allocation2 + $0xa8] sm:$0xf]
        %v2038 = vld [vmem:[#allocation2 + $0xac] sm:$0xf]
        %v2039 = vld [vmem:[#allocation2 + $0xb0] sm:$0xf]
        %v2040 = vld [vmem:[#allocation2 + $0xb4] sm:$0xf]
        %v2041 = vld [vmem:[#allocation2 + $0xb8] sm:$0xf]
        %v2042 = vld [vmem:[#allocation2 + $0xbc] sm:$0xf]
        %v2043 = vld [vmem:[#allocation2 + $0xc0] sm:$0xf]
        %v2044 = vld [vmem:[#allocation2 + $0xc4] sm:$0xf]
        %v2045 = vld [vmem:[#allocation2 + $0xc8] sm:$0xf]
        %v2046 = vld [vmem:[#allocation2 + $0xcc] sm:$0xf]
        %v2047 = vld [vmem:[#allocation2 + $0xd0] sm:$0xf]
        %v2048 = vld [vmem:[#allocation2 + $0xd4] sm:$0xf]
        %v2049 = vld [vmem:[#allocation2 + $0xd8] sm:$0xf]
        %v2050 = vld [vmem:[#allocation2 + $0xdc] sm:$0xf]
        %v2051 = vld [vmem:[#allocation2 + $0xe0] sm:$0xf]
        %v2052 = vld [vmem:[#allocation2 + $0xe4] sm:$0xf]
        %v2053 = vld [vmem:[#allocation2 + $0xe8] sm:$0xf]
        %v2054 = vld [vmem:[#allocation2 + $0xec] sm:$0xf]
        %v2055 = vld [vmem:[#allocation2 + $0xf0] sm:$0xf]
        %v2056 = vld [vmem:[#allocation2 + $0xf4] sm:$0xf]
        %v2057 = vld [vmem:[#allocation2 + $0xf8] sm:$0xf]
        %v2058 = vld [vmem:[#allocation2 + $0xfc] sm:$0xf]
        %v2123 = vunpack.c.l.b16 %v1995
        %v2124 = vunpack.c.l.b16 %v1996
        %v2125 = vunpack.c.l.b16 %v1997
        %v2126 = vunpack.c.l.b16 %v1998
        %v2127 = vunpack.c.l.b16 %v1999
        %v2128 = vunpack.c.l.b16 %v2000
        %v2129 = vunpack.c.l.b16 %v2001
        %v2130 = vunpack.c.l.b16 %v2002
        %v2131 = vunpack.c.l.b16 %v2003
        %v2132 = vunpack.c.l.b16 %v2004
        %v2133 = vunpack.c.l.b16 %v2005
        %v2134 = vunpack.c.l.b16 %v2006
        %v2135 = vunpack.c.l.b16 %v2007
        %v2136 = vunpack.c.l.b16 %v2008
        %v2137 = vunpack.c.l.b16 %v2009
        %v2138 = vunpack.c.l.b16 %v2010
        %v2139 = vunpack.c.l.b16 %v2011
        %v2140 = vunpack.c.l.b16 %v2012
        %v2141 = vunpack.c.l.b16 %v2013
        %v2142 = vunpack.c.l.b16 %v2014
        %v2143 = vunpack.c.l.b16 %v2015
        %v2144 = vunpack.c.l.b16 %v2016
        %v2145 = vunpack.c.l.b16 %v2017
        %v2146 = vunpack.c.l.b16 %v2018
        %v2147 = vunpack.c.l.b16 %v2019
        %v2148 = vunpack.c.l.b16 %v2020
        %v2149 = vunpack.c.l.b16 %v2021
        %v2150 = vunpack.c.l.b16 %v2022
        %v2151 = vunpack.c.l.b16 %v2023
        %v2152 = vunpack.c.l.b16 %v2024
        %v2153 = vunpack.c.l.b16 %v2025
        %v2154 = vunpack.c.l.b16 %v2026
        %v2155 = vunpack.c.l.b16 %v2027
        %v2156 = vunpack.c.l.b16 %v2028
        %v2157 = vunpack.c.l.b16 %v2029
        %v2158 = vunpack.c.l.b16 %v2030
        %v2159 = vunpack.c.l.b16 %v2031
        %v2160 = vunpack.c.l.b16 %v2032
        %v2161 = vunpack.c.l.b16 %v2033
        %v2162 = vunpack.c.l.b16 %v2034
        %v2163 = vunpack.c.l.b16 %v2035
        %v2164 = vunpack.c.l.b16 %v2036
        %v2165 = vunpack.c.l.b16 %v2037
        %v2166 = vunpack.c.l.b16 %v2038
        %v2167 = vunpack.c.l.b16 %v2039
        %v2168 = vunpack.c.l.b16 %v2040
        %v2169 = vunpack.c.l.b16 %v2041
        %v2170 = vunpack.c.l.b16 %v2042
        %v2171 = vunpack.c.l.b16 %v2043
        %v2172 = vunpack.c.l.b16 %v2044
        %v2173 = vunpack.c.l.b16 %v2045
        %v2174 = vunpack.c.l.b16 %v2046
        %v2175 = vunpack.c.l.b16 %v2047
        %v2176 = vunpack.c.l.b16 %v2048
        %v2177 = vunpack.c.l.b16 %v2049
        %v2178 = vunpack.c.l.b16 %v2050
        %v2179 = vunpack.c.l.b16 %v2051
        %v2180 = vunpack.c.l.b16 %v2052
        %v2181 = vunpack.c.l.b16 %v2053
        %v2182 = vunpack.c.l.b16 %v2054
        %v2183 = vunpack.c.l.b16 %v2055
        %v2184 = vunpack.c.l.b16 %v2056
        %v2185 = vunpack.c.l.b16 %v2057
        %v2186 = vunpack.c.l.b16 %v2058
        %v2187 = vpack.c.b16 %v2124, %v2123
        %v2188 = vpack.c.b16 %v2126, %v2125
        %v2189 = vpack.c.b16 %v2128, %v2127
        %v2190 = vpack.c.b16 %v2130, %v2129
        %v2191 = vpack.c.b16 %v2132, %v2131
        %v2192 = vpack.c.b16 %v2134, %v2133
        %v2193 = vpack.c.b16 %v2136, %v2135
        %v2194 = vpack.c.b16 %v2138, %v2137
        %v2195 = vpack.c.b16 %v2140, %v2139
        %v2196 = vpack.c.b16 %v2142, %v2141
        %v2197 = vpack.c.b16 %v2144, %v2143
        %v2198 = vpack.c.b16 %v2146, %v2145
        %v2199 = vpack.c.b16 %v2148, %v2147
        %v2200 = vpack.c.b16 %v2150, %v2149
        %v2201 = vpack.c.b16 %v2152, %v2151
        %v2202 = vpack.c.b16 %v2154, %v2153
        %v2203 = vpack.c.b16 %v2156, %v2155
        %v2204 = vpack.c.b16 %v2158, %v2157
        %v2205 = vpack.c.b16 %v2160, %v2159
        %v2206 = vpack.c.b16 %v2162, %v2161
        %v2207 = vpack.c.b16 %v2164, %v2163
        %v2208 = vpack.c.b16 %v2166, %v2165
        %v2209 = vpack.c.b16 %v2168, %v2167
        %v2210 = vpack.c.b16 %v2170, %v2169
        %v2211 = vpack.c.b16 %v2172, %v2171
        %v2212 = vpack.c.b16 %v2174, %v2173
        %v2213 = vpack.c.b16 %v2176, %v2175
        %v2214 = vpack.c.b16 %v2178, %v2177
        %v2215 = vpack.c.b16 %v2180, %v2179
        %v2216 = vpack.c.b16 %v2182, %v2181
        %v2217 = vpack.c.b16 %v2184, %v2183
        %v2218 = vpack.c.b16 %v2186, %v2185
        %2251 = vmatpush.bf16.msra.mxu0 %v2194
        %2252 = vmatpush.bf16.msra.mxu0 %v2193
        %2253 = vmatpush.bf16.msra.mxu0 %v2192
        %2254 = vmatpush.bf16.msra.mxu0 %v2191
        %2255 = vmatpush.bf16.msra.mxu0 %v2190
        %2256 = vmatpush.bf16.msra.mxu0 %v2189
        %2257 = vmatpush.bf16.msra.mxu0 %v2188
        %2258 = vmatpush.bf16.msra.mxu0 %v2187
        %2259 = vmatmul.bf16.gmra.mxu0 %v1979
        %v2260 = vpop.f32.mrf.mxu0
        %v2261 = vadd.f32 %v1021, %v2260
        %v2262 = vpop.f32.mrf.mxu0
        %v2263 = vadd.f32 %v1046, %v2262
        %2264 = vmatmul.bf16.gmra.mxu0 %v1983
        %v2265 = vpop.f32.mrf.mxu0
        %v2266 = vadd.f32 %v1071, %v2265
        %v2267 = vpop.f32.mrf.mxu0
        %v2268 = vadd.f32 %v1096, %v2267
        %2269 = vmatmul.bf16.gmra.mxu0 %v1987
        %v2270 = vpop.f32.mrf.mxu0
        %v2271 = vadd.f32 %v1121, %v2270
        %v2272 = vpop.f32.mrf.mxu0
        %v2273 = vadd.f32 %v1146, %v2272
        %2274 = vmatmul.bf16.gmra.mxu0 %v1991
        %v2275 = vpop.f32.mrf.mxu0
        %v2276 = vadd.f32 %v1171, %v2275
        %v2277 = vpop.f32.mrf.mxu0
        %v2278 = vadd.f32 %v1196, %v2277
        %2279 = vdwg.mxu0
        %2280 = vmatpush.bf16.msra.mxu0 %v2202
        %2281 = vmatpush.bf16.msra.mxu0 %v2201
        %2282 = vmatpush.bf16.msra.mxu0 %v2200
        %2283 = vmatpush.bf16.msra.mxu0 %v2199
        %2284 = vmatpush.bf16.msra.mxu0 %v2198
        %2285 = vmatpush.bf16.msra.mxu0 %v2197
        %2286 = vmatpush.bf16.msra.mxu0 %v2196
        %2287 = vmatpush.bf16.msra.mxu0 %v2195
        %2288 = vmatmul.bf16.gmra.mxu0 %v1980
        %v2289 = vpop.f32.mrf.mxu0
        %v2290 = vadd.f32 %v2261, %v2289
        %v2291 = vpop.f32.mrf.mxu0
        %v2292 = vadd.f32 %v2263, %v2291
        %2293 = vmatmul.bf16.gmra.mxu0 %v1984
        %v2294 = vpop.f32.mrf.mxu0
        %v2295 = vadd.f32 %v2266, %v2294
        %v2296 = vpop.f32.mrf.mxu0
        %v2297 = vadd.f32 %v2268, %v2296
        %2298 = vmatmul.bf16.gmra.mxu0 %v1988
        %v2299 = vpop.f32.mrf.mxu0
        %v2300 = vadd.f32 %v2271, %v2299
        %v2301 = vpop.f32.mrf.mxu0
        %v2302 = vadd.f32 %v2273, %v2301
        %2303 = vmatmul.bf16.gmra.mxu0 %v1992
        %v2304 = vpop.f32.mrf.mxu0
        %v2305 = vadd.f32 %v2276, %v2304
        %v2306 = vpop.f32.mrf.mxu0
        %v2307 = vadd.f32 %v2278, %v2306
        %2308 = vdwg.mxu0
        %2309 = vmatpush.bf16.msra.mxu0 %v2210
        %2310 = vmatpush.bf16.msra.mxu0 %v2209
        %2311 = vmatpush.bf16.msra.mxu0 %v2208
        %2312 = vmatpush.bf16.msra.mxu0 %v2207
        %2313 = vmatpush.bf16.msra.mxu0 %v2206
        %2314 = vmatpush.bf16.msra.mxu0 %v2205
        %2315 = vmatpush.bf16.msra.mxu0 %v2204
        %2316 = vmatpush.bf16.msra.mxu0 %v2203
        %2317 = vmatmul.bf16.gmra.mxu0 %v1981
        %v2318 = vpop.f32.mrf.mxu0
        %v2319 = vadd.f32 %v2290, %v2318
        %v2320 = vpop.f32.mrf.mxu0
        %v2321 = vadd.f32 %v2292, %v2320
        %2322 = vmatmul.bf16.gmra.mxu0 %v1985
        %v2323 = vpop.f32.mrf.mxu0
        %v2324 = vadd.f32 %v2295, %v2323
        %v2325 = vpop.f32.mrf.mxu0
        %v2326 = vadd.f32 %v2297, %v2325
        %2327 = vmatmul.bf16.gmra.mxu0 %v1989
        %v2328 = vpop.f32.mrf.mxu0
        %v2329 = vadd.f32 %v2300, %v2328
        %v2330 = vpop.f32.mrf.mxu0
        %v2331 = vadd.f32 %v2302, %v2330
        %2332 = vmatmul.bf16.gmra.mxu0 %v1993
        %v2333 = vpop.f32.mrf.mxu0
        %v2334 = vadd.f32 %v2305, %v2333
        %v2335 = vpop.f32.mrf.mxu0
        %v2336 = vadd.f32 %v2307, %v2335
        %2337 = vdwg.mxu0
        %2338 = vmatpush.bf16.msra.mxu0 %v2218
        %2339 = vmatpush.bf16.msra.mxu0 %v2217
        %2340 = vmatpush.bf16.msra.mxu0 %v2216
        %2341 = vmatpush.bf16.msra.mxu0 %v2215
        %2342 = vmatpush.bf16.msra.mxu0 %v2214
        %2343 = vmatpush.bf16.msra.mxu0 %v2213
        %2344 = vmatpush.bf16.msra.mxu0 %v2212
        %2345 = vmatpush.bf16.msra.mxu0 %v2211
        %2346 = vmatmul.bf16.gmra.mxu0 %v1982
        %v2347 = vpop.f32.mrf.mxu0
        %v2348 = vadd.f32 %v2319, %v2347
        %v2349 = vpop.f32.mrf.mxu0
        %v2350 = vadd.f32 %v2321, %v2349
        %2351 = vmatmul.bf16.gmra.mxu0 %v1986
        %v2352 = vpop.f32.mrf.mxu0
        %v2353 = vadd.f32 %v2324, %v2352
        %v2354 = vpop.f32.mrf.mxu0
        %v2355 = vadd.f32 %v2326, %v2354
        %2356 = vmatmul.bf16.gmra.mxu0 %v1990
        %v2357 = vpop.f32.mrf.mxu0
        %v2358 = vadd.f32 %v2329, %v2357
        %v2359 = vpop.f32.mrf.mxu0
        %v2360 = vadd.f32 %v2331, %v2359
        %2361 = vmatmul.bf16.gmra.mxu0 %v1994
        %v2362 = vpop.f32.mrf.mxu0
        %v2363 = vadd.f32 %v2334, %v2362
        %v2364 = vpop.f32.mrf.mxu0
        %v2365 = vadd.f32 %v2336, %v2364
        %2366 = vdwg.mxu0
        %2367 = vst [vmem:[%s270] sm:$0xff] %v2348
        %2368 = vst [vmem:[%s270 + $0x8] sm:$0xff] %v2350
        %2369 = vst [vmem:[%s270 + $0x10] sm:$0xff] %v2353
        %2370 = vst [vmem:[%s270 + $0x18] sm:$0xff] %v2355
        %2371 = vst [vmem:[%s270 + $0x20] sm:$0xff] %v2358
        %2372 = vst [vmem:[%s270 + $0x28] sm:$0xff] %v2360
        %2373 = vst [vmem:[%s270 + $0x30] sm:$0xff] %v2363
        %2374 = vst [vmem:[%s270 + $0x38] sm:$0xff] %v2365
        %s2375 = smul.u32 8, %s18
        %p2376 = scmp.lt.s32.totalorder %s2375, 15
        %s2377 = scalar_select %p2376, %s2375, 15
        %s2378 = smul.addr %s2377, 8
        %s2379 = scalar_lea.vmem %s6, %s2378
        // Predicated region
        $region49: #{mixer_forward.1} parent=43 // pred_check
          %p2380 = pneg %p167
        $region50: #{mixer_forward.1} parent=43 // pred_check_branch
          %2382 = sbr.rel (%p2380) target = $region52
        $region51: #{mixer_forward.1} parent=43 // pred_region
          %s2383 = smul.u32 8, %s18
        $region52: #{mixer_forward.1} parent=43 // pred_fallthru
          _
      $region44: #{mixer_forward.1} parent=5 // pred_fallthru
        _
      %p2384 = scmp.le.s32.totalorder 2, %s13
      // Predicated region
      $region53: #{mixer_forward.1} parent=5 // pred_check
        %p2385 = pneg %p2384
      $region54: #{mixer_forward.1} parent=5 // pred_check_branch
        %2387 = sbr.rel (%p2385) target = $region56
      $region55: #{mixer_forward.1} parent=5 // pred_region
        %s2388 = ssub.s32 %s13, 2
        // Predicated region
        $region57: #{mixer_forward.1} parent=55 // pred_check
          %p2389 = pneg %p173
        $region58: #{mixer_forward.1} parent=55 // pred_check_branch
          %2391 = sbr.rel (%p2389) target = $region60
        $region59: #{mixer_forward.1} parent=55 // pred_region
          %s2392 = smul.u32 8, %s19
          %p2393 = scmp.lt.s32.totalorder %s2392, 15
          %s2394 = scalar_select %p2393, %s2392, 15
          %s2395 = smul.addr %s2394, 8
          %s2396 = scalar_lea.vmem %s6, %s2395
        $region60: #{mixer_forward.1} parent=55 // pred_fallthru
          _
      $region56: #{mixer_forward.1} parent=5 // pred_fallthru
        _
    $region6: #{mixer_forward.1} parent=1 // loop_footer
      %s17 = sadd.s32 1, %s13
    $region7: #{mixer_forward.1} parent=1 // loop_footer_branch
      %12 = sbr.rel target = $region3
    $region8: #{mixer_forward.1} parent=1 // loop_exit
      _
    %2397 = vsyncpa [#allocation3], 1
    %s2398 = scalar_lea.sflag [#allocation3], 1
    %2399 = vsyncpa %s2398, 1

</llo_original>
